<compile_context>
chip_gen: v7x
topology: tpu7x:2x2x1
jax: 0.10.0
libtpu: 0.0.40
codegen_flags: <defaults>
</compile_context>

<pallas_src>
import functools

import jax
import jax.numpy as jnp
from jax.experimental import pallas as pl
from jax.experimental.pallas import tpu as pltpu


# ---------------------------------------------------------------------------
# Kernel
# ---------------------------------------------------------------------------
def mlp_kernel(x_ref, w1_ref, b1_ref, w2_ref, b2_ref, w3_ref, b3_ref,
               w4_ref, b4_ref, o_ref):
    # x arrives f32 and is cast to bf16 in-kernel (VPU op, hides under the MXU matmul).
    # Every dot accumulates in f32 (preferred_element_type); bias add + ReLU run in f32,
    # activations are downcast to bf16 only on the way back into the next MXU matmul.
    x = x_ref[...].astype(jnp.bfloat16)

    h = jnp.dot(x, w1_ref[...], preferred_element_type=jnp.float32) + b1_ref[...]
    h = jnp.maximum(h, 0.0).astype(jnp.bfloat16)

    h = jnp.dot(h, w2_ref[...], preferred_element_type=jnp.float32) + b2_ref[...]
    h = jnp.maximum(h, 0.0).astype(jnp.bfloat16)

    h = jnp.dot(h, w3_ref[...], preferred_element_type=jnp.float32) + b3_ref[...]
    h = jnp.maximum(h, 0.0).astype(jnp.bfloat16)

    h = jnp.dot(h, w4_ref[...], preferred_element_type=jnp.float32) + b4_ref[...]
    o_ref[...] = h.astype(o_ref.dtype)


# ---------------------------------------------------------------------------
# Static configuration helpers (run once, outside jit)
# ---------------------------------------------------------------------------
def _round_up(x, m):
    return ((x + m - 1) // m) * m


def _device_kind() -> str:
    try:
        return jax.devices()[0].device_kind.lower()
    except Exception:
        return ""


def _vmem_capacity_bytes() -> int:
    try:
        return int(pltpu.get_tpu_info().vmem_capacity_bytes)
    except Exception:
        # Conservative fallback: v7x has 64 MiB/TC, v5e/v6e have 128 MiB.
        return 64 * 1024 * 1024 if "7" in _device_kind() else 128 * 1024 * 1024


def _pick_tile_b(B: int, kind: str) -> int:
    if B <= 128:
        return B                                   # collapsed grid; launch-overhead bound
    if "7" in kind:                                # v7x: 2 TCs -> keep >= 2 parallel tiles
        return 128 if B < 1024 else 256
    if "v6" in kind or "6e" in kind:               # v6e: big tiles amortize per-step cost
        return min(1024, _round_up(B, 128))
    return min(512, _round_up(B, 128))             # v5e / unknown: 128-aligned, <= 512


@functools.lru_cache(maxsize=None)
def _single_buffered_weights_supported() -> bool:
    """Probe whether this JAX accepts pl.Buffered(1) (single-buffered resident blocks)."""
    def _copy(x_ref, o_ref):
        o_ref[...] = x_ref[...]
    try:
        spec = pl.BlockSpec((8, 128), lambda i: (0, 0), pipeline_mode=pl.Buffered(1))
        out = pl.pallas_call(
            _copy,
            out_shape=jax.ShapeDtypeStruct((8, 128), jnp.float32),
            grid=(1,),
            in_specs=[spec],
            out_specs=pl.BlockSpec((8, 128), lambda i: (0, 0)),
        )(jnp.zeros((8, 128), jnp.float32))
        jax.block_until_ready(out)
        return True
    except Exception:
        return False


# ---------------------------------------------------------------------------
# One-time parameter preparation (bf16 cast + lane-dense padding)
# ---------------------------------------------------------------------------
def prepare_params(params):
    """One-time prep: bf16 weights; zero-pad the 64-wide layer-3/4 boundary and the final
    output to lane-dense 128 columns.  Biases stay f32 (added in the f32 accumulator).
    Padding is numerically exact: padded b3 entries are 0 -> ReLU(0)=0 -> the matching
    zero rows of padded w4 contribute nothing, and the output slab is sliced to d_out."""
    w3, b3 = params["w3"], params["b3"]
    w4, b4 = params["w4"], params["b4"]
    d_out = w4.shape[1]
    h3 = w3.shape[1]
    h3_pad = _round_up(h3, 128)
    d_out_pad = _round_up(d_out, 128)

    prepared = {
        "w1": params["w1"].astype(jnp.bfloat16),
        "b1": params["b1"],
        "w2": params["w2"].astype(jnp.bfloat16),
        "b2": params["b2"],
        "w3": jnp.pad(w3, ((0, 0), (0, h3_pad - h3))).astype(jnp.bfloat16),
        "b3": jnp.pad(b3, ((0, 0), (0, h3_pad - h3))),
        "w4": jnp.pad(w4, ((0, h3_pad - h3), (0, d_out_pad - d_out))).astype(jnp.bfloat16),
        "b4": jnp.pad(b4, ((0, 0), (0, d_out_pad - d_out))),
    }
    prepared = jax.block_until_ready(prepared)
    return prepared, d_out


# ---------------------------------------------------------------------------
# Forward
# ---------------------------------------------------------------------------
@functools.partial(
    jax.jit,
    static_argnames=("tile_b", "d_out", "single_buffer_weights", "vmem_limit"))
def _mlp_forward_impl(x, prepared, *, tile_b, d_out, single_buffer_weights, vmem_limit):
    B, d_in = x.shape
    h1 = prepared["w1"].shape[1]
    h2 = prepared["w2"].shape[1]
    h3_pad = prepared["w3"].shape[1]
    d_out_pad = prepared["w4"].shape[1]

    num_tiles = pl.cdiv(B, tile_b)
    B_pad = num_tiles * tile_b
    if B_pad != B:                                   # ragged batch: zero-pad, slice later
        x = jnp.pad(x, ((0, B_pad - B), (0, 0)))

    def resident_spec(shape):
        # Whole-array block, constant index_map (fetched once across the grid).
        idx_map = lambda i, _s=shape: (0,) * len(_s)
        if single_buffer_weights:
            return pl.BlockSpec(shape, idx_map, pipeline_mode=pl.Buffered(1))
        return pl.BlockSpec(shape, idx_map)

    w_bytes = 2 * (d_in * h1 + h1 * h2 + h2 * h3_pad + h3_pad * d_out_pad)
    b_bytes = 4 * (h1 + h2 + h3_pad + d_out_pad)
    flops = 2 * B_pad * (d_in * h1 + h1 * h2 + h2 * h3_pad + h3_pad * d_out_pad)
    bytes_accessed = B_pad * d_in * 4 + B_pad * d_out_pad * 4 + w_bytes + b_bytes
    cost = pl.CostEstimate(flops=flops, transcendentals=0, bytes_accessed=bytes_accessed)

    dim_sem = ("parallel",) if num_tiles > 1 else ("arbitrary",)

    out = pl.pallas_call(
        mlp_kernel,
        out_shape=jax.ShapeDtypeStruct((B_pad, d_out_pad), jnp.float32),
        grid_spec=pltpu.PrefetchScalarGridSpec(
            num_scalar_prefetch=0,
            grid=(num_tiles,),
            in_specs=[
                pl.BlockSpec((tile_b, d_in), lambda i: (i, 0)),       # f32 x tile
                resident_spec(prepared["w1"].shape), resident_spec(prepared["b1"].shape),
                resident_spec(prepared["w2"].shape), resident_spec(prepared["b2"].shape),
                resident_spec(prepared["w3"].shape), resident_spec(prepared["b3"].shape),
                resident_spec(prepared["w4"].shape), resident_spec(prepared["b4"].shape),
            ],
            out_specs=pl.BlockSpec((tile_b, d_out_pad), lambda i: (i, 0)),
        ),
        compiler_params=pltpu.CompilerParams(
            dimension_semantics=dim_sem,
            vmem_limit_bytes=vmem_limit,
        ),
        cost_estimate=cost,
    )(x, prepared["w1"], prepared["b1"], prepared["w2"], prepared["b2"],
      prepared["w3"], prepared["b3"], prepared["w4"], prepared["b4"])

    return out[:B, :d_out]


def regression_model_forward(x, prepared, d_out, *, tile_b=None):
    """x: (B, d_in) float32.  prepared: output of prepare_params.  Returns (B, d_out) f32."""
    B, d_in = x.shape
    kind = _device_kind()
    if tile_b is None:
        tile_b = _pick_tile_b(B, kind)

    single_buffer = _single_buffered_weights_supported()

    # Static VMEM budget (bytes): resident bf16 weights (1 or 2 buffers), f32 biases,
    # double-buffered f32 x/out tiles, plus f32 activation headroom.
    h1 = prepared["w1"].shape[1]
    h2 = prepared["w2"].shape[1]
    h3_pad = prepared["w3"].shape[1]
    d_out_pad = prepared["w4"].shape[1]
    w_bytes = 2 * (d_in * h1 + h1 * h2 + h2 * h3_pad + h3_pad * d_out_pad)
    b_bytes = 4 * (h1 + h2 + h3_pad + d_out_pad)
    io_bytes = 2 * (tile_b * d_in * 4 + tile_b * d_out_pad * 4)
    act_bytes = 2 * tile_b * max(h1, h2) * 4
    vmem_needed = (1 if single_buffer else 2) * w_bytes + 2 * b_bytes + io_bytes + act_bytes

    vmem_cap = _vmem_capacity_bytes()
    vmem_limit_cap = int(0.6 * vmem_cap)            # headroom for compiler scratch/spills
    vmem_limit = max(int(vmem_needed * 1.25), 16 * 1024 * 1024)
    if vmem_limit > vmem_limit_cap:
        raise ValueError(
            f"MLP head needs ~{vmem_needed >> 20} MiB VMEM (tile_b={tile_b}, d_in={d_in}) "
            f"which exceeds the {vmem_limit_cap >> 20} MiB budget on this chip; "
            "reduce tile_b or add K-tiling for the first layer.")

    return _mlp_forward_impl(x, prepared, tile_b=tile_b, d_out=d_out,
                             single_buffer_weights=single_buffer, vmem_limit=vmem_limit)


# ---------------------------------------------------------------------------
# Parameter init + pure-JAX references
# ---------------------------------------------------------------------------
def init_params(key, input_dim, output_dim):
    """Deterministic init mimicking nn.Linear's U(-1/sqrt(fan_in), 1/sqrt(fan_in))."""
    dims = [(input_dim, 512), (512, 512), (512, 64), (64, output_dim)]
    params = {}
    keys = jax.random.split(key, 2 * len(dims))
    for idx, (fan_in, fan_out) in enumerate(dims):
        bound = 1.0 / jnp.sqrt(jnp.float32(fan_in))
        w = jax.random.uniform(keys[2 * idx], (fan_in, fan_out),
                               minval=-bound, maxval=bound, dtype=jnp.float32)
        b = jax.random.uniform(keys[2 * idx + 1], (1, fan_out),
                               minval=-bound, maxval=bound, dtype=jnp.float32)
        params[f"w{idx + 1}"] = w
        params[f"b{idx + 1}"] = b
    return params


def reference_forward_f32(x, params):
    h = jnp.maximum(x @ params["w1"] + params["b1"], 0.0)
    h = jnp.maximum(h @ params["w2"] + params["b2"], 0.0)
    h = jnp.maximum(h @ params["w3"] + params["b3"], 0.0)
    return h @ params["w4"] + params["b4"]


def reference_forward_mixed(x, params):
    """Pure-JAX reference mirroring the kernel's bf16-input / f32-accumulate recipe."""
    def layer(h, w, b, relu):
        y = jnp.dot(h.astype(jnp.bfloat16), w.astype(jnp.bfloat16),
                    preferred_element_type=jnp.float32) + b
        return jnp.maximum(y, 0.0) if relu else y
    h = layer(x, params["w1"], params["b1"], True)
    h = layer(h, params["w2"], params["b2"], True)
    h = layer(h, params["w3"], params["b3"], True)
    return layer(h, params["w4"], params["b4"], False)


if __name__ == "__main__":
    key = jax.random.PRNGKey(0)
    k_param, k_x = jax.random.split(key)

    batch = 16          # flattened resnet features -> MLP head
    input_dim = 32
    output_dim = 8

    params = init_params(k_param, input_dim, output_dim)
    prepared, d_out = prepare_params(params)        # one-time bf16 cast + padding
    x = jax.random.normal(k_x, (batch, input_dim), dtype=jnp.float32)

    out = regression_model_forward(x, prepared, d_out)   # grid collapses to (1,) at B=16
    out = jax.block_until_ready(out)
    assert out.shape == (batch, output_dim), out.shape

    # Exact-recipe check (same bf16/f32 mixed precision as the kernel).
    ref_mixed = reference_forward_mixed(x, params)
    assert jnp.allclose(out, ref_mixed, atol=1e-3, rtol=1e-3), "mismatch vs mixed ref"

    # Loose sanity check vs full-f32 math (bf16 weight/activation rounding only).
    ref_f32 = reference_forward_f32(x, params)
    assert jnp.allclose(out, ref_f32, atol=5e-2, rtol=5e-2), "mismatch vs f32 ref"

    print("KERNEL_OK")
</pallas_src>

<mosaic_0001>
module attributes {stable_mosaic.version = 11 : i64} {
  func.func @_copy(%arg0: i32, %arg1: memref<8x128xf32, #tpu.memory_space<vmem>>, %arg2: memref<8x128xf32, #tpu.memory_space<vmem>>) attributes {dimension_semantics = [#tpu.dimension_semantics<arbitrary>], iteration_bounds = array<i64: 1>, scalar_prefetch = 0 : i64, scratch_operands = 0 : i64, tpu.core_type = #tpu.core_type<tc>, window_params = [{pipeline_mode = #tpu.pipeline_mode<synchronous>, transform_indices = @transform_0, window_bounds = array<i64: 8, 128>}, {pipeline_mode = #tpu.pipeline_mode<synchronous>, transform_indices = @transform_1, window_bounds = array<i64: 8, 128>}]} {
    %c0 = arith.constant 0 : index
    %c0_0 = arith.constant 0 : index
    %0 = vector.load %arg1[%c0, %c0_0] : memref<8x128xf32, #tpu.memory_space<vmem>>, vector<8x128xf32>
    %c0_1 = arith.constant 0 : index
    %c0_2 = arith.constant 0 : index
    %1 = vector.load %arg2[%c0_1, %c0_2] : memref<8x128xf32, #tpu.memory_space<vmem>>, vector<8x128xf32>
    tpu.vector_store %arg2[%c0_1, %c0_2], %0 {strides = array<i32>} : memref<8x128xf32, #tpu.memory_space<vmem>>, vector<8x128xf32>,
    return
  }
  func.func @transform_0(%arg0: i32) -> (i32, i32) {
    %c0_i32 = arith.constant 0 : i32
    %c0_i32_0 = arith.constant 0 : i32
    %c0_i32_1 = arith.constant 0 : i32
    return %c0_i32, %c0_i32_0 : i32, i32
  }
  func.func @transform_1(%arg0: i32) -> (i32, i32) {
    %c0_i32 = arith.constant 0 : i32
    %c0_i32_0 = arith.constant 0 : i32
    %c0_i32_1 = arith.constant 0 : i32
    return %c0_i32, %c0_i32_0 : i32, i32
  }
}

module attributes {stable_mosaic.version = 11 : i64} {
  func.func @mlp_kernel(%arg0: i32, %arg1: memref<16x32xf32, #tpu.memory_space<vmem>>, %arg2: memref<32x512xbf16, #tpu.memory_space<vmem>>, %arg3: memref<1x512xf32, #tpu.memory_space<vmem>>, %arg4: memref<512x512xbf16, #tpu.memory_space<vmem>>, %arg5: memref<1x512xf32, #tpu.memory_space<vmem>>, %arg6: memref<512x128xbf16, #tpu.memory_space<vmem>>, %arg7: memref<1x128xf32, #tpu.memory_space<vmem>>, %arg8: memref<128x128xbf16, #tpu.memory_space<vmem>>, %arg9: memref<1x128xf32, #tpu.memory_space<vmem>>, %arg10: memref<16x128xf32, #tpu.memory_space<vmem>>) attributes {dimension_semantics = [#tpu.dimension_semantics<arbitrary>], iteration_bounds = array<i64: 1>, scalar_prefetch = 0 : i64, scratch_operands = 0 : i64, tpu.core_type = #tpu.core_type<tc>, window_params = [{transform_indices = @transform_0, window_bounds = array<i64: 16, 32>}, {pipeline_mode = #tpu.pipeline_mode<synchronous>, transform_indices = @transform_1, window_bounds = array<i64: 32, 512>}, {pipeline_mode = #tpu.pipeline_mode<synchronous>, transform_indices = @transform_2, window_bounds = array<i64: 1, 512>}, {pipeline_mode = #tpu.pipeline_mode<synchronous>, transform_indices = @transform_3, window_bounds = array<i64: 512, 512>}, {pipeline_mode = #tpu.pipeline_mode<synchronous>, transform_indices = @transform_4, window_bounds = array<i64: 1, 512>}, {pipeline_mode = #tpu.pipeline_mode<synchronous>, transform_indices = @transform_5, window_bounds = array<i64: 512, 128>}, {pipeline_mode = #tpu.pipeline_mode<synchronous>, transform_indices = @transform_6, window_bounds = array<i64: 1, 128>}, {pipeline_mode = #tpu.pipeline_mode<synchronous>, transform_indices = @transform_7, window_bounds = array<i64: 128, 128>}, {pipeline_mode = #tpu.pipeline_mode<synchronous>, transform_indices = @transform_8, window_bounds = array<i64: 1, 128>}, {transform_indices = @transform_9, window_bounds = array<i64: 16, 128>}]} {
    %c0 = arith.constant 0 : index
    %c0_0 = arith.constant 0 : index
    %0 = vector.load %arg1[%c0, %c0_0] : memref<16x32xf32, #tpu.memory_space<vmem>>, vector<16x32xf32>
    %1 = arith.truncf %0 : vector<16x32xf32> to vector<16x32xbf16>
    %c0_1 = arith.constant 0 : index
    %c0_2 = arith.constant 0 : index
    %2 = vector.load %arg2[%c0_1, %c0_2] : memref<32x512xbf16, #tpu.memory_space<vmem>>, vector<32x512xbf16>
    %cst = arith.constant dense<0.000000e+00> : vector<16x512xf32>
    %3 = tpu.matmul %1, %2, %cst {dimension_numbers = #tpu.dot_dimension_numbers<[1], [0], [0], [1], [0, 0, 1, 1], [], []>} : vector<16x32xbf16>, vector<32x512xbf16>, vector<16x512xf32> -> vector<16x512xf32>
    %c0_3 = arith.constant 0 : index
    %c0_4 = arith.constant 0 : index
    %4 = vector.load %arg3[%c0_3, %c0_4] : memref<1x512xf32, #tpu.memory_space<vmem>>, vector<1x512xf32>
    %5 = vector.broadcast %4 : vector<1x512xf32> to vector<16x512xf32>
    %6 = arith.addf %3, %5 : vector<16x512xf32>
    %cst_5 = arith.constant 0.000000e+00 : f32
    %7 = vector.broadcast %cst_5 : f32 to vector<16x512xf32>
    %8 = arith.maximumf %6, %7 : vector<16x512xf32>
    %9 = arith.truncf %8 : vector<16x512xf32> to vector<16x512xbf16>
    %c0_6 = arith.constant 0 : index
    %c0_7 = arith.constant 0 : index
    %10 = vector.load %arg4[%c0_6, %c0_7] : memref<512x512xbf16, #tpu.memory_space<vmem>>, vector<512x512xbf16>
    %cst_8 = arith.constant dense<0.000000e+00> : vector<16x512xf32>
    %11 = tpu.matmul %9, %10, %cst_8 {dimension_numbers = #tpu.dot_dimension_numbers<[1], [0], [0], [1], [0, 0, 1, 1], [], []>} : vector<16x512xbf16>, vector<512x512xbf16>, vector<16x512xf32> -> vector<16x512xf32>
    %c0_9 = arith.constant 0 : index
    %c0_10 = arith.constant 0 : index
    %12 = vector.load %arg5[%c0_9, %c0_10] : memref<1x512xf32, #tpu.memory_space<vmem>>, vector<1x512xf32>
    %13 = vector.broadcast %12 : vector<1x512xf32> to vector<16x512xf32>
    %14 = arith.addf %11, %13 : vector<16x512xf32>
    %cst_11 = arith.constant 0.000000e+00 : f32
    %15 = vector.broadcast %cst_11 : f32 to vector<16x512xf32>
    %16 = arith.maximumf %14, %15 : vector<16x512xf32>
    %17 = arith.truncf %16 : vector<16x512xf32> to vector<16x512xbf16>
    %c0_12 = arith.constant 0 : index
    %c0_13 = arith.constant 0 : index
    %18 = vector.load %arg6[%c0_12, %c0_13] : memref<512x128xbf16, #tpu.memory_space<vmem>>, vector<512x128xbf16>
    %cst_14 = arith.constant dense<0.000000e+00> : vector<16x128xf32>
    %19 = tpu.matmul %17, %18, %cst_14 {dimension_numbers = #tpu.dot_dimension_numbers<[1], [0], [0], [1], [0, 0, 1, 1], [], []>} : vector<16x512xbf16>, vector<512x128xbf16>, vector<16x128xf32> -> vector<16x128xf32>
    %c0_15 = arith.constant 0 : index
    %c0_16 = arith.constant 0 : index
    %20 = vector.load %arg7[%c0_15, %c0_16] : memref<1x128xf32, #tpu.memory_space<vmem>>, vector<1x128xf32>
    %21 = vector.broadcast %20 : vector<1x128xf32> to vector<16x128xf32>
    %22 = arith.addf %19, %21 : vector<16x128xf32>
    %cst_17 = arith.constant 0.000000e+00 : f32
    %23 = vector.broadcast %cst_17 : f32 to vector<16x128xf32>
    %24 = arith.maximumf %22, %23 : vector<16x128xf32>
    %25 = arith.truncf %24 : vector<16x128xf32> to vector<16x128xbf16>
    %c0_18 = arith.constant 0 : index
    %c0_19 = arith.constant 0 : index
    %26 = vector.load %arg8[%c0_18, %c0_19] : memref<128x128xbf16, #tpu.memory_space<vmem>>, vector<128x128xbf16>
    %cst_20 = arith.constant dense<0.000000e+00> : vector<16x128xf32>
    %27 = tpu.matmul %25, %26, %cst_20 {dimension_numbers = #tpu.dot_dimension_numbers<[1], [0], [0], [1], [0, 0, 1, 1], [], []>} : vector<16x128xbf16>, vector<128x128xbf16>, vector<16x128xf32> -> vector<16x128xf32>
    %c0_21 = arith.constant 0 : index
    %c0_22 = arith.constant 0 : index
    %28 = vector.load %arg9[%c0_21, %c0_22] : memref<1x128xf32, #tpu.memory_space<vmem>>, vector<1x128xf32>
    %29 = vector.broadcast %28 : vector<1x128xf32> to vector<16x128xf32>
    %30 = arith.addf %27, %29 : vector<16x128xf32>
    %c0_23 = arith.constant 0 : index
    %c0_24 = arith.constant 0 : index
    %31 = vector.load %arg10[%c0_23, %c0_24] : memref<16x128xf32, #tpu.memory_space<vmem>>, vector<16x128xf32>
    tpu.vector_store %arg10[%c0_23, %c0_24], %30 {strides = array<i32>} : memref<16x128xf32, #tpu.memory_space<vmem>>, vector<16x128xf32>,
    return
  }
  func.func @transform_0(%arg0: i32) -> (i32, i32) {
    %c0_i32 = arith.constant 0 : i32
    %c0_i32_0 = arith.constant 0 : i32
    return %arg0, %c0_i32 : i32, i32
  }
  func.func @transform_1(%arg0: i32) -> (i32, i32) {
    %c0_i32 = arith.constant 0 : i32
    %c0_i32_0 = arith.constant 0 : i32
    %c0_i32_1 = arith.constant 0 : i32
    return %c0_i32, %c0_i32_0 : i32, i32
  }
  func.func @transform_2(%arg0: i32) -> (i32, i32) {
    %c0_i32 = arith.constant 0 : i32
    %c0_i32_0 = arith.constant 0 : i32
    %c0_i32_1 = arith.constant 0 : i32
    return %c0_i32, %c0_i32_0 : i32, i32
  }
  func.func @transform_3(%arg0: i32) -> (i32, i32) {
    %c0_i32 = arith.constant 0 : i32
    %c0_i32_0 = arith.constant 0 : i32
    %c0_i32_1 = arith.constant 0 : i32
    return %c0_i32, %c0_i32_0 : i32, i32
  }
  func.func @transform_4(%arg0: i32) -> (i32, i32) {
    %c0_i32 = arith.constant 0 : i32
    %c0_i32_0 = arith.constant 0 : i32
    %c0_i32_1 = arith.constant 0 : i32
    return %c0_i32, %c0_i32_0 : i32, i32
  }
  func.func @transform_5(%arg0: i32) -> (i32, i32) {
    %c0_i32 = arith.constant 0 : i32
    %c0_i32_0 = arith.constant 0 : i32
    %c0_i32_1 = arith.constant 0 : i32
    return %c0_i32, %c0_i32_0 : i32, i32
  }
  func.func @transform_6(%arg0: i32) -> (i32, i32) {
    %c0_i32 = arith.constant 0 : i32
    %c0_i32_0 = arith.constant 0 : i32
    %c0_i32_1 = arith.constant 0 : i32
    return %c0_i32, %c0_i32_0 : i32, i32
  }
  func.func @transform_7(%arg0: i32) -> (i32, i32) {
    %c0_i32 = arith.constant 0 : i32
    %c0_i32_0 = arith.constant 0 : i32
    %c0_i32_1 = arith.constant 0 : i32
    return %c0_i32, %c0_i32_0 : i32, i32
  }
  func.func @transform_8(%arg0: i32) -> (i32, i32) {
    %c0_i32 = arith.constant 0 : i32
    %c0_i32_0 = arith.constant 0 : i32
    %c0_i32_1 = arith.constant 0 : i32
    return %c0_i32, %c0_i32_0 : i32, i32
  }
  func.func @transform_9(%arg0: i32) -> (i32, i32) {
    %c0_i32 = arith.constant 0 : i32
    %c0_i32_0 = arith.constant 0 : i32
    return %arg0, %c0_i32 : i32, i32
  }
}

</mosaic_0001>

<llo_original>
// kernel: tpu_custom_call.1
$region0: #{tpu_custom_call.1}
  #allocation0 [shape = 'u32[]', space=smem, size = 0x4, offset = 0x4, fixed_abs, tag = 'smem constant byte address 0x4 - core index']
  #allocation1 [shape = 'u32[144,128]{1,0:T(1,128)}', space=vmem, size = 0x12000, scoped, tag = 'internal scratch']
  %s0 = inlined_call_operand.hbm [shape: f32[8,128], index: 0, kind: input, shape index: {}]
  %s1 = inlined_call_operand.hbm [shape: f32[8,128], index: 1, kind: output, shape index: {}]
  %s2 = sld [smem:[#allocation0]]
  $region18: #{tpu_custom_call.1} parent=0
    _
  %s4 = ssub.s32 1, %s2
  %s5 = scalar_select 0, %s4, %s2
  $region1: #{tpu_custom_call.1} parent=0
    #allocation2 [shape = 'u8[4096]{0}', space=vmem, size = 0x1000, scoped, tag = 'input window, operand 0, single buffered']
    #allocation3 [shape = 's32[1]{0}', space=sflag, size = 0x4, scoped, tag = 'scoped memory for tpu_custom_call.1']
    #allocation4 [shape = 's32[1]{0}', space=sflag, size = 0x4, scoped, tag = 'scoped memory for tpu_custom_call.1']
    #allocation5 [shape = 'u8[4096]{0}', space=vmem, size = 0x1000, scoped, tag = 'output window, operand 0, single buffered']
    %6 = vsyncpa [#allocation3], 0
    %7 = vsyncpa [#allocation4], 0
    // Predicated region
    $region2: #{tpu_custom_call.1} parent=1 // pred_check
      _
    $region3: #{tpu_custom_call.1} parent=1 // pred_check_branch
      %9 = sbr.rel (0) target = $region5
    $region4: #{tpu_custom_call.1} parent=1 // pred_region
      %s11 = ssub.s32 128, 128
      %12 = vsyncadd [#allocation3], %s11
      %s14 = sshll.u32 [#allocation2], 4
      %s15 = int_to_ptr.vmem [resolvable:$true] %s14
      %17 = dma.hbm_to_vmem [thread:$0]  %s0, 128, %s15, [#allocation3]
    $region5: #{tpu_custom_call.1} parent=1 // pred_fallthru
      _
    // Predicated region
    $region6: #{tpu_custom_call.1} parent=1 // pred_check
      _
    $region7: #{tpu_custom_call.1} parent=1 // pred_check_branch
      %19 = sbr.rel (0) target = $region9
    $region8: #{tpu_custom_call.1} parent=1 // pred_region
      %20 = dma.done [#allocation3], 128
    $region9: #{tpu_custom_call.1} parent=1 // pred_fallthru
      _
    %v21 = vld [vmem:[#allocation2] sm:$0xff]
    %22 = vst [vmem:[#allocation5] sm:$0xff] %v21
    // Predicated region
    $region10: #{tpu_custom_call.1} parent=1 // pred_check
      _
    $region11: #{tpu_custom_call.1} parent=1 // pred_check_branch
      %24 = sbr.rel (0) target = $region13
    $region12: #{tpu_custom_call.1} parent=1 // pred_region
      %s26 = ssub.s32 128, 128
      %27 = vsyncadd [#allocation4], %s26
      %s29 = sshll.u32 [#allocation5], 4
      %s30 = int_to_ptr.vmem [resolvable:$true] %s29
      %32 = dma.vmem_to_hbm [thread:$0]  %s30, 128, %s1, [#allocation4]
    $region13: #{tpu_custom_call.1} parent=1 // pred_fallthru
      _
    // Predicated region
    $region14: #{tpu_custom_call.1} parent=1 // pred_check
      _
    $region15: #{tpu_custom_call.1} parent=1 // pred_check_branch
      %34 = sbr.rel (0) target = $region17
    $region16: #{tpu_custom_call.1} parent=1 // pred_region
      %35 = dma.done [#allocation4], 128
    $region17: #{tpu_custom_call.1} parent=1 // pred_fallthru
      _
    %36 = vsyncpa [#allocation3], 1
    %37 = vsyncpa [#allocation4], 1

// kernel: _mlp_forward_impl.1
$region0: #{_mlp_forward_impl.1}
  #allocation0 [shape = 'u32[]', space=smem, size = 0x4, offset = 0x4, fixed_abs, tag = 'smem constant byte address 0x4 - core index']
  #allocation1 [shape = 'u32[144,128]{1,0:T(1,128)}', space=vmem, size = 0x12000, scoped, tag = 'internal scratch']
  %s0 = inlined_call_operand.hbm [shape: f32[16,32], index: 0, kind: input, shape index: {}]
  %s1 = inlined_call_operand.hbm [shape: bf16[32,512], index: 1, kind: input, shape index: {}]
  %s2 = inlined_call_operand.hbm [shape: f32[1,512], index: 2, kind: input, shape index: {}]
  %s3 = inlined_call_operand.hbm [shape: bf16[512,512], index: 3, kind: input, shape index: {}]
  %s4 = inlined_call_operand.vmem [shape: f32[1,512], index: 4, kind: input, shape index: {}]
  %s5 = inlined_call_operand.hbm [shape: bf16[512,128], index: 5, kind: input, shape index: {}]
  %s6 = inlined_call_operand.vmem [shape: f32[1,128], index: 6, kind: input, shape index: {}]
  %s7 = inlined_call_operand.hbm [shape: bf16[128,128], index: 7, kind: input, shape index: {}]
  %s8 = inlined_call_operand.vmem [shape: f32[1,128], index: 8, kind: input, shape index: {}]
  %s9 = inlined_call_operand.vmem [shape: f32[16,128], index: 9, kind: output, shape index: {}]
  %s10 = sld [smem:[#allocation0]]
  $region70: #{_mlp_forward_impl.1} parent=0
    _
  %s12 = ssub.s32 1, %s10
  %s13 = scalar_select 0, %s12, %s10
  $region1: #{_mlp_forward_impl.1} parent=0
    #allocation2 [shape = 'u8[8192]{0}', space=vmem, size = 0x2000, scoped, tag = 'input window, operand 0, single buffered']
    #allocation3 [shape = 's32[1]{0}', space=sflag, size = 0x4, scoped, tag = 'scoped memory for _mlp_forward_impl.1']
    #allocation4 [shape = 'u8[32768]{0}', space=vmem, size = 0x8000, scoped, tag = 'input window, operand 1, single buffered']
    #allocation5 [shape = 's32[1]{0}', space=sflag, size = 0x4, scoped, tag = 'scoped memory for _mlp_forward_impl.1']
    #allocation6 [shape = 'u8[2048]{0}', space=vmem, size = 0x800, scoped, tag = 'input window, operand 2, single buffered']
    #allocation7 [shape = 'u8[524288]{0}', space=vmem, size = 0x80000, scoped, tag = 'input window, operand 3, single buffered']
    #allocation8 [shape = 's32[1]{0}', space=sflag, size = 0x4, scoped, tag = 'scoped memory for _mlp_forward_impl.1']
    #allocation9 [shape = 'u8[131072]{0}', space=vmem, size = 0x20000, scoped, tag = 'input window, operand 5, single buffered']
    #allocation10 [shape = 'u8[32768]{0}', space=vmem, size = 0x8000, scoped, tag = 'input window, operand 7, single buffered']
    #allocation11 [shape = 's32[1]{0}', space=sflag, size = 0x4, scoped, tag = 'scoped memory for _mlp_forward_impl.1']
    %14 = vsyncpa [#allocation3], 0
    %15 = vsyncpa [#allocation5], 0
    %16 = vsyncpa [#allocation8], 0
    %17 = vsyncpa [#allocation11], 0
    // Predicated region
    $region2: #{_mlp_forward_impl.1} parent=1 // pred_check
      _
    $region3: #{_mlp_forward_impl.1} parent=1 // pred_check_branch
      %19 = sbr.rel (0) target = $region5
    $region4: #{_mlp_forward_impl.1} parent=1 // pred_region
      %s21 = ssub.s32 256, 256
      %22 = vsyncadd [#allocation3], %s21
      %s23 = sshll.u32 [#allocation2], 4
      %s24 = int_to_ptr.vmem [resolvable:$true] %s23
      %29 = dma.hbm_to_vmem [thread:$0]  %s0, 256, %s24, [#allocation3], 128, 128, 8
    $region5: #{_mlp_forward_impl.1} parent=1 // pred_fallthru
      _
    // Predicated region
    $region6: #{_mlp_forward_impl.1} parent=1 // pred_check
      _
    $region7: #{_mlp_forward_impl.1} parent=1 // pred_check_branch
      %31 = sbr.rel (0) target = $region9
    $region8: #{_mlp_forward_impl.1} parent=1 // pred_region
      %s33 = ssub.s32 1024, 1024
      %34 = vsyncadd [#allocation5], %s33
      %s35 = sshll.u32 [#allocation4], 4
      %s36 = int_to_ptr.vmem [resolvable:$true] %s35
      %41 = dma.hbm_to_vmem [thread:$0]  %s1, 1024, %s36, [#allocation5], 256, 256, 16
    $region9: #{_mlp_forward_impl.1} parent=1 // pred_fallthru
      _
    // Predicated region
    $region10: #{_mlp_forward_impl.1} parent=1 // pred_check
      _
    $region11: #{_mlp_forward_impl.1} parent=1 // pred_check_branch
      %43 = sbr.rel (0) target = $region13
    $region12: #{_mlp_forward_impl.1} parent=1 // pred_region
      %s45 = ssub.s32 64, 64
      %46 = vsyncadd [#allocation5], %s45
      %s48 = sshll.u32 [#allocation6], 4
      %s49 = int_to_ptr.vmem [resolvable:$true] %s48
      %51 = dma.hbm_to_vmem [thread:$0]  %s2, 64, %s49, [#allocation5]
    $region13: #{_mlp_forward_impl.1} parent=1 // pred_fallthru
      _
    // Predicated region
    $region14: #{_mlp_forward_impl.1} parent=1 // pred_check
      _
    $region15: #{_mlp_forward_impl.1} parent=1 // pred_check_branch
      %53 = sbr.rel (0) target = $region17
    $region16: #{_mlp_forward_impl.1} parent=1 // pred_region
      %s55 = ssub.s32 16384, 16384
      %56 = vsyncadd [#allocation8], %s55
      %s57 = sshll.u32 [#allocation7], 4
      %s58 = int_to_ptr.vmem [resolvable:$true] %s57
      %63 = dma.hbm_to_vmem [thread:$0]  %s3, 16384, %s58, [#allocation8], 256, 256, 16
    $region17: #{_mlp_forward_impl.1} parent=1 // pred_fallthru
      _
    // Predicated region
    $region18: #{_mlp_forward_impl.1} parent=1 // pred_check
      _
    $region19: #{_mlp_forward_impl.1} parent=1 // pred_check_branch
      %65 = sbr.rel (0) target = $region21
    $region20: #{_mlp_forward_impl.1} parent=1 // pred_region
      _
    $region21: #{_mlp_forward_impl.1} parent=1 // pred_fallthru
      _
    // Predicated region
    $region22: #{_mlp_forward_impl.1} parent=1 // pred_check
      _
    $region23: #{_mlp_forward_impl.1} parent=1 // pred_check_branch
      %67 = sbr.rel (0) target = $region25
    $region24: #{_mlp_forward_impl.1} parent=1 // pred_region
      %s69 = ssub.s32 4096, 4096
      %70 = vsyncadd [#allocation8], %s69
      %s71 = sshll.u32 [#allocation9], 4
      %s72 = int_to_ptr.vmem [resolvable:$true] %s71
      %77 = dma.hbm_to_vmem [thread:$0]  %s5, 4096, %s72, [#allocation8], 64, 64, 4
    $region25: #{_mlp_forward_impl.1} parent=1 // pred_fallthru
      _
    // Predicated region
    $region26: #{_mlp_forward_impl.1} parent=1 // pred_check
      _
    $region27: #{_mlp_forward_impl.1} parent=1 // pred_check_branch
      %79 = sbr.rel (0) target = $region29
    $region28: #{_mlp_forward_impl.1} parent=1 // pred_region
      _
    $region29: #{_mlp_forward_impl.1} parent=1 // pred_fallthru
      _
    // Predicated region
    $region30: #{_mlp_forward_impl.1} parent=1 // pred_check
      _
    $region31: #{_mlp_forward_impl.1} parent=1 // pred_check_branch
      %81 = sbr.rel (0) target = $region33
    $region32: #{_mlp_forward_impl.1} parent=1 // pred_region
      %s83 = ssub.s32 1024, 1024
      %84 = vsyncadd [#allocation11], %s83
      %s85 = sshll.u32 [#allocation10], 4
      %s86 = int_to_ptr.vmem [resolvable:$true] %s85
      %91 = dma.hbm_to_vmem [thread:$0]  %s7, 1024, %s86, [#allocation11], 64, 64, 4
    $region33: #{_mlp_forward_impl.1} parent=1 // pred_fallthru
      _
    // Predicated region
    $region34: #{_mlp_forward_impl.1} parent=1 // pred_check
      _
    $region35: #{_mlp_forward_impl.1} parent=1 // pred_check_branch
      %93 = sbr.rel (0) target = $region37
    $region36: #{_mlp_forward_impl.1} parent=1 // pred_region
      _
    $region37: #{_mlp_forward_impl.1} parent=1 // pred_fallthru
      _
    // Predicated region
    $region38: #{_mlp_forward_impl.1} parent=1 // pred_check
      _
    $region39: #{_mlp_forward_impl.1} parent=1 // pred_check_branch
      %95 = sbr.rel (0) target = $region41
    $region40: #{_mlp_forward_impl.1} parent=1 // pred_region
      %96 = dma.done [#allocation3], 256
    $region41: #{_mlp_forward_impl.1} parent=1 // pred_fallthru
      _
    // Predicated region
    $region42: #{_mlp_forward_impl.1} parent=1 // pred_check
      _
    $region43: #{_mlp_forward_impl.1} parent=1 // pred_check_branch
      %98 = sbr.rel (0) target = $region45
    $region44: #{_mlp_forward_impl.1} parent=1 // pred_region
      %99 = dma.done [#allocation5], 1024
    $region45: #{_mlp_forward_impl.1} parent=1 // pred_fallthru
      _
    // Predicated region
    $region46: #{_mlp_forward_impl.1} parent=1 // pred_check
      _
    $region47: #{_mlp_forward_impl.1} parent=1 // pred_check_branch
      %101 = sbr.rel (0) target = $region49
    $region48: #{_mlp_forward_impl.1} parent=1 // pred_region
      %102 = dma.done [#allocation5], 64
    $region49: #{_mlp_forward_impl.1} parent=1 // pred_fallthru
      _
    // Predicated region
    $region50: #{_mlp_forward_impl.1} parent=1 // pred_check
      _
    $region51: #{_mlp_forward_impl.1} parent=1 // pred_check_branch
      %104 = sbr.rel (0) target = $region53
    $region52: #{_mlp_forward_impl.1} parent=1 // pred_region
      %105 = dma.done [#allocation8], 16384
    $region53: #{_mlp_forward_impl.1} parent=1 // pred_fallthru
      _
    // Predicated region
    $region54: #{_mlp_forward_impl.1} parent=1 // pred_check
      _
    $region55: #{_mlp_forward_impl.1} parent=1 // pred_check_branch
      %107 = sbr.rel (0) target = $region57
    $region56: #{_mlp_forward_impl.1} parent=1 // pred_region
      %108 = dma.done [#allocation8], 4096
    $region57: #{_mlp_forward_impl.1} parent=1 // pred_fallthru
      _
    // Predicated region
    $region58: #{_mlp_forward_impl.1} parent=1 // pred_check
      _
    $region59: #{_mlp_forward_impl.1} parent=1 // pred_check_branch
      %110 = sbr.rel (0) target = $region61
    $region60: #{_mlp_forward_impl.1} parent=1 // pred_region
      %111 = dma.done [#allocation11], 1024
    $region61: #{_mlp_forward_impl.1} parent=1 // pred_fallthru
      _
    %v113 = vld [vmem:[#allocation2] sm:$0xff]
    %v114 = vld [vmem:[#allocation2 + $0x8] sm:$0xff]
    %v115 = vpack.c.bf16 %v114, %v113
    %v116 = vld [vmem:[#allocation4] sm:$0xff]
    %v117 = vld [vmem:[#allocation4 + $0x8] sm:$0xff]
    %v118 = vld [vmem:[#allocation4 + $0x10] sm:$0xff]
    %v119 = vld [vmem:[#allocation4 + $0x18] sm:$0xff]
    %v120 = vld [vmem:[#allocation4 + $0x20] sm:$0xff]
    %v121 = vld [vmem:[#allocation4 + $0x28] sm:$0xff]
    %v122 = vld [vmem:[#allocation4 + $0x30] sm:$0xff]
    %v123 = vld [vmem:[#allocation4 + $0x38] sm:$0xff]
    %v124 = vld [vmem:[#allocation6] sm:$0xf]
    %v126 = vlaneseq
    %v127 = vshrl.u32 %v126, 7
    %v128 = vsub.s32 0, %v127
    %v129 = vrot.slane %v124, %v128
    %v130 = vlaneseq
    %v131 = vshrl.u32 %v130, 7
    %v132 = vsub.s32 1, %v131
    %v133 = vrot.slane %v124, %v132
    %v134 = vlaneseq
    %v135 = vshrl.u32 %v134, 7
    %v136 = vsub.s32 2, %v135
    %v137 = vrot.slane %v124, %v136
    %v138 = vlaneseq
    %v139 = vshrl.u32 %v138, 7
    %v140 = vsub.s32 3, %v139
    %v141 = vrot.slane %v124, %v140
    %v154 = vunpack.c.l.b16 %v116
    %v155 = vunpack.c.h.b16 %v116
    %v156 = vunpack.c.l.b16 %v117
    %v157 = vunpack.c.h.b16 %v117
    %v158 = vunpack.c.l.b16 %v118
    %v159 = vunpack.c.h.b16 %v118
    %v160 = vunpack.c.l.b16 %v119
    %v161 = vunpack.c.h.b16 %v119
    %v162 = vunpack.c.l.b16 %v120
    %v163 = vunpack.c.h.b16 %v120
    %v164 = vunpack.c.l.b16 %v121
    %v165 = vunpack.c.h.b16 %v121
    %v166 = vunpack.c.l.b16 %v122
    %v167 = vunpack.c.h.b16 %v122
    %v168 = vunpack.c.l.b16 %v123
    %v169 = vunpack.c.h.b16 %v123
    %v170 = vpack.c.b16 %v158, %v154
    %v171 = vpack.c.b16 %v159, %v155
    %v172 = vpack.c.b16 %v160, %v156
    %v173 = vpack.c.b16 %v161, %v157
    %v174 = vpack.c.b16 %v166, %v162
    %v175 = vpack.c.b16 %v167, %v163
    %v176 = vpack.c.b16 %v168, %v164
    %v177 = vpack.c.b16 %v169, %v165
    %vm186 = vcmask 261120
    %v188 = vsel %vm186, %v115, 0
    %190 = vmatprep.subr.bf16.mxu0 %v171
    %191 = vmatpush1.bf16.msra.mxu0 %v170
    %192 = vmatprep.subr.bf16.mxu0 %v175
    %193 = vmatpush1.bf16.msra.mxu0 %v174
    %194 = vmatprep.subr.bf16.mxu0 0
    %195 = vmatpush1.bf16.msra.mxu0 0
    %196 = vmatprep.subr.bf16.mxu0 0
    %197 = vmatpush1.bf16.msra.mxu0 0
    %198 = vmatprep.subr.bf16.mxu0 0
    %199 = vmatpush1.bf16.msra.mxu0 0
    %200 = vmatprep.subr.bf16.mxu0 0
    %201 = vmatpush1.bf16.msra.mxu0 0
    %202 = vmatprep.subr.bf16.mxu0 0
    %203 = vmatpush1.bf16.msra.mxu0 0
    %204 = vmatprep.subr.bf16.mxu0 0
    %205 = vmatpush1.bf16.msra.mxu0 0
    %206 = vmatprep.subr.bf16.mxu0 0
    %207 = vmatpush1.bf16.msra.mxu0 0
    %208 = vmatprep.subr.bf16.mxu0 0
    %209 = vmatpush1.bf16.msra.mxu0 0
    %210 = vmatprep.subr.bf16.mxu0 0
    %211 = vmatpush1.bf16.msra.mxu0 0
    %212 = vmatprep.subr.bf16.mxu0 0
    %213 = vmatpush1.bf16.msra.mxu0 0
    %214 = vmatprep.subr.bf16.mxu0 0
    %215 = vmatpush1.bf16.msra.mxu0 0
    %216 = vmatprep.subr.bf16.mxu0 0
    %217 = vmatpush1.bf16.msra.mxu0 0
    %218 = vmatprep.subr.bf16.mxu0 0
    %219 = vmatpush1.bf16.msra.mxu0 0
    %220 = vmatprep.subr.bf16.mxu0 0
    %221 = vmatpush1.bf16.msra.mxu0 0
    %222 = vmatprep.mubr.bf16.mxu0 0
    %223 = vmatmul.mubr.bf16.gmra.mrb[0].mxu0 %v188
    %v224 = vpop.f32.mrb[0].mxu0
    %v225 = vadd.f32 %v129, %v224
    %v226 = vpop.f32.mrb[0].mxu0
    %v227 = vadd.f32 %v133, %v226
    %v228 = vpop.f32.mrb[0].mxu0
    %v229 = vadd.f32 %v129, %v228
    %v230 = vpop.f32.mrb[0].mxu0
    %v231 = vadd.f32 %v133, %v230
    %232 = vdwg.mxu0
    %233 = vmatprep.subr.bf16.mxu0 %v173
    %234 = vmatpush1.bf16.msra.mxu0 %v172
    %235 = vmatprep.subr.bf16.mxu0 %v177
    %236 = vmatpush1.bf16.msra.mxu0 %v176
    %237 = vmatprep.subr.bf16.mxu0 0
    %238 = vmatpush1.bf16.msra.mxu0 0
    %239 = vmatprep.subr.bf16.mxu0 0
    %240 = vmatpush1.bf16.msra.mxu0 0
    %241 = vmatprep.subr.bf16.mxu0 0
    %242 = vmatpush1.bf16.msra.mxu0 0
    %243 = vmatprep.subr.bf16.mxu0 0
    %244 = vmatpush1.bf16.msra.mxu0 0
    %245 = vmatprep.subr.bf16.mxu0 0
    %246 = vmatpush1.bf16.msra.mxu0 0
    %247 = vmatprep.subr.bf16.mxu0 0
    %248 = vmatpush1.bf16.msra.mxu0 0
    %249 = vmatprep.subr.bf16.mxu0 0
    %250 = vmatpush1.bf16.msra.mxu0 0
    %251 = vmatprep.subr.bf16.mxu0 0
    %252 = vmatpush1.bf16.msra.mxu0 0
    %253 = vmatprep.subr.bf16.mxu0 0
    %254 = vmatpush1.bf16.msra.mxu0 0
    %255 = vmatprep.subr.bf16.mxu0 0
    %256 = vmatpush1.bf16.msra.mxu0 0
    %257 = vmatprep.subr.bf16.mxu0 0
    %258 = vmatpush1.bf16.msra.mxu0 0
    %259 = vmatprep.subr.bf16.mxu0 0
    %260 = vmatpush1.bf16.msra.mxu0 0
    %261 = vmatprep.subr.bf16.mxu0 0
    %262 = vmatpush1.bf16.msra.mxu0 0
    %263 = vmatprep.subr.bf16.mxu0 0
    %264 = vmatpush1.bf16.msra.mxu0 0
    %265 = vmatprep.mubr.bf16.mxu0 0
    %266 = vmatmul.mubr.bf16.gmra.mrb[0].mxu0 %v188
    %v267 = vpop.f32.mrb[0].mxu0
    %v268 = vadd.f32 %v137, %v267
    %v269 = vpop.f32.mrb[0].mxu0
    %v270 = vadd.f32 %v141, %v269
    %v271 = vpop.f32.mrb[0].mxu0
    %v272 = vadd.f32 %v137, %v271
    %v273 = vpop.f32.mrb[0].mxu0
    %v274 = vadd.f32 %v141, %v273
    %275 = vdwg.mxu0
    %v276 = vmax.f32 %v225, 0.0
    %v277 = vmax.f32 %v227, 0.0
    %v278 = vmax.f32 %v268, 0.0
    %v279 = vmax.f32 %v270, 0.0
    %v280 = vmax.f32 %v229, 0.0
    %v281 = vmax.f32 %v231, 0.0
    %v282 = vmax.f32 %v272, 0.0
    %v283 = vmax.f32 %v274, 0.0
    %v284 = vpack.c.bf16 %v280, %v276
    %v285 = vpack.c.bf16 %v281, %v277
    %v286 = vpack.c.bf16 %v282, %v278
    %v287 = vpack.c.bf16 %v283, %v279
    %v288 = vld [vmem:[#allocation7] sm:$0xff]
    %v289 = vld [vmem:[#allocation7 + $0x8] sm:$0xff]
    %v290 = vld [vmem:[#allocation7 + $0x10] sm:$0xff]
    %v291 = vld [vmem:[#allocation7 + $0x18] sm:$0xff]
    %v292 = vld [vmem:[#allocation7 + $0x20] sm:$0xff]
    %v293 = vld [vmem:[#allocation7 + $0x28] sm:$0xff]
    %v294 = vld [vmem:[#allocation7 + $0x30] sm:$0xff]
    %v295 = vld [vmem:[#allocation7 + $0x38] sm:$0xff]
    %v296 = vld [vmem:[#allocation7 + $0x40] sm:$0xff]
    %v297 = vld [vmem:[#allocation7 + $0x48] sm:$0xff]
    %v298 = vld [vmem:[#allocation7 + $0x50] sm:$0xff]
    %v299 = vld [vmem:[#allocation7 + $0x58] sm:$0xff]
    %v300 = vld [vmem:[#allocation7 + $0x60] sm:$0xff]
    %v301 = vld [vmem:[#allocation7 + $0x68] sm:$0xff]
    %v302 = vld [vmem:[#allocation7 + $0x70] sm:$0xff]
    %v303 = vld [vmem:[#allocation7 + $0x78] sm:$0xff]
    %v304 = vld [vmem:[#allocation7 + $0x80] sm:$0xff]
    %v305 = vld [vmem:[#allocation7 + $0x88] sm:$0xff]
    %v306 = vld [vmem:[#allocation7 + $0x90] sm:$0xff]
    %v307 = vld [vmem:[#allocation7 + $0x98] sm:$0xff]
    %v308 = vld [vmem:[#allocation7 + $0xa0] sm:$0xff]
    %v309 = vld [vmem:[#allocation7 + $0xa8] sm:$0xff]
    %v310 = vld [vmem:[#allocation7 + $0xb0] sm:$0xff]
    %v311 = vld [vmem:[#allocation7 + $0xb8] sm:$0xff]
    %v312 = vld [vmem:[#allocation7 + $0xc0] sm:$0xff]
    %v313 = vld [vmem:[#allocation7 + $0xc8] sm:$0xff]
    %v314 = vld [vmem:[#allocation7 + $0xd0] sm:$0xff]
    %v315 = vld [vmem:[#allocation7 + $0xd8] sm:$0xff]
    %v316 = vld [vmem:[#allocation7 + $0xe0] sm:$0xff]
    %v317 = vld [vmem:[#allocation7 + $0xe8] sm:$0xff]
    %v318 = vld [vmem:[#allocation7 + $0xf0] sm:$0xff]
    %v319 = vld [vmem:[#allocation7 + $0xf8] sm:$0xff]
    %v320 = vld [vmem:[#allocation7 + $0x100] sm:$0xff]
    %v321 = vld [vmem:[#allocation7 + $0x108] sm:$0xff]
    %v322 = vld [vmem:[#allocation7 + $0x110] sm:$0xff]
    %v323 = vld [vmem:[#allocation7 + $0x118] sm:$0xff]
    %v324 = vld [vmem:[#allocation7 + $0x120] sm:$0xff]
    %v325 = vld [vmem:[#allocation7 + $0x128] sm:$0xff]
    %v326 = vld [vmem:[#allocation7 + $0x130] sm:$0xff]
    %v327 = vld [vmem:[#allocation7 + $0x138] sm:$0xff]
    %v328 = vld [vmem:[#allocation7 + $0x140] sm:$0xff]
    %v329 = vld [vmem:[#allocation7 + $0x148] sm:$0xff]
    %v330 = vld [vmem:[#allocation7 + $0x150] sm:$0xff]
    %v331 = vld [vmem:[#allocation7 + $0x158] sm:$0xff]
    %v332 = vld [vmem:[#allocation7 + $0x160] sm:$0xff]
    %v333 = vld [vmem:[#allocation7 + $0x168] sm:$0xff]
    %v334 = vld [vmem:[#allocation7 + $0x170] sm:$0xff]
    %v335 = vld [vmem:[#allocation7 + $0x178] sm:$0xff]
    %v336 = vld [vmem:[#allocation7 + $0x180] sm:$0xff]
    %v337 = vld [vmem:[#allocation7 + $0x188] sm:$0xff]
    %v338 = vld [vmem:[#allocation7 + $0x190] sm:$0xff]
    %v339 = vld [vmem:[#allocation7 + $0x198] sm:$0xff]
    %v340 = vld [vmem:[#allocation7 + $0x1a0] sm:$0xff]
    %v341 = vld [vmem:[#allocation7 + $0x1a8] sm:$0xff]
    %v342 = vld [vmem:[#allocation7 + $0x1b0] sm:$0xff]
    %v343 = vld [vmem:[#allocation7 + $0x1b8] sm:$0xff]
    %v344 = vld [vmem:[#allocation7 + $0x1c0] sm:$0xff]
    %v345 = vld [vmem:[#allocation7 + $0x1c8] sm:$0xff]
    %v346 = vld [vmem:[#allocation7 + $0x1d0] sm:$0xff]
    %v347 = vld [vmem:[#allocation7 + $0x1d8] sm:$0xff]
    %v348 = vld [vmem:[#allocation7 + $0x1e0] sm:$0xff]
    %v349 = vld [vmem:[#allocation7 + $0x1e8] sm:$0xff]
    %v350 = vld [vmem:[#allocation7 + $0x1f0] sm:$0xff]
    %v351 = vld [vmem:[#allocation7 + $0x1f8] sm:$0xff]
    %v352 = vld [vmem:[#allocation7 + $0x200] sm:$0xff]
    %v353 = vld [vmem:[#allocation7 + $0x208] sm:$0xff]
    %v354 = vld [vmem:[#allocation7 + $0x210] sm:$0xff]
    %v355 = vld [vmem:[#allocation7 + $0x218] sm:$0xff]
    %v356 = vld [vmem:[#allocation7 + $0x220] sm:$0xff]
    %v357 = vld [vmem:[#allocation7 + $0x228] sm:$0xff]
    %v358 = vld [vmem:[#allocation7 + $0x230] sm:$0xff]
    %v359 = vld [vmem:[#allocation7 + $0x238] sm:$0xff]
    %v360 = vld [vmem:[#allocation7 + $0x240] sm:$0xff]
    %v361 = vld [vmem:[#allocation7 + $0x248] sm:$0xff]
    %v362 = vld [vmem:[#allocation7 + $0x250] sm:$0xff]
    %v363 = vld [vmem:[#allocation7 + $0x258] sm:$0xff]
    %v364 = vld [vmem:[#allocation7 + $0x260] sm:$0xff]
    %v365 = vld [vmem:[#allocation7 + $0x268] sm:$0xff]
    %v366 = vld [vmem:[#allocation7 + $0x270] sm:$0xff]
    %v367 = vld [vmem:[#allocation7 + $0x278] sm:$0xff]
    %v368 = vld [vmem:[#allocation7 + $0x280] sm:$0xff]
    %v369 = vld [vmem:[#allocation7 + $0x288] sm:$0xff]
    %v370 = vld [vmem:[#allocation7 + $0x290] sm:$0xff]
    %v371 = vld [vmem:[#allocation7 + $0x298] sm:$0xff]
    %v372 = vld [vmem:[#allocation7 + $0x2a0] sm:$0xff]
    %v373 = vld [vmem:[#allocation7 + $0x2a8] sm:$0xff]
    %v374 = vld [vmem:[#allocation7 + $0x2b0] sm:$0xff]
    %v375 = vld [vmem:[#allocation7 + $0x2b8] sm:$0xff]
    %v376 = vld [vmem:[#allocation7 + $0x2c0] sm:$0xff]
    %v377 = vld [vmem:[#allocation7 + $0x2c8] sm:$0xff]
    %v378 = vld [vmem:[#allocation7 + $0x2d0] sm:$0xff]
    %v379 = vld [vmem:[#allocation7 + $0x2d8] sm:$0xff]
    %v380 = vld [vmem:[#allocation7 + $0x2e0] sm:$0xff]
    %v381 = vld [vmem:[#allocation7 + $0x2e8] sm:$0xff]
    %v382 = vld [vmem:[#allocation7 + $0x2f0] sm:$0xff]
    %v383 = vld [vmem:[#allocation7 + $0x2f8] sm:$0xff]
    %v384 = vld [vmem:[#allocation7 + $0x300] sm:$0xff]
    %v385 = vld [vmem:[#allocation7 + $0x308] sm:$0xff]
    %v386 = vld [vmem:[#allocation7 + $0x310] sm:$0xff]
    %v387 = vld [vmem:[#allocation7 + $0x318] sm:$0xff]
    %v388 = vld [vmem:[#allocation7 + $0x320] sm:$0xff]
    %v389 = vld [vmem:[#allocation7 + $0x328] sm:$0xff]
    %v390 = vld [vmem:[#allocation7 + $0x330] sm:$0xff]
    %v391 = vld [vmem:[#allocation7 + $0x338] sm:$0xff]
    %v392 = vld [vmem:[#allocation7 + $0x340] sm:$0xff]
    %v393 = vld [vmem:[#allocation7 + $0x348] sm:$0xff]
    %v394 = vld [vmem:[#allocation7 + $0x350] sm:$0xff]
    %v395 = vld [vmem:[#allocation7 + $0x358] sm:$0xff]
    %v396 = vld [vmem:[#allocation7 + $0x360] sm:$0xff]
    %v397 = vld [vmem:[#allocation7 + $0x368] sm:$0xff]
    %v398 = vld [vmem:[#allocation7 + $0x370] sm:$0xff]
    %v399 = vld [vmem:[#allocation7 + $0x378] sm:$0xff]
    %v400 = vld [vmem:[#allocation7 + $0x380] sm:$0xff]
    %v401 = vld [vmem:[#allocation7 + $0x388] sm:$0xff]
    %v402 = vld [vmem:[#allocation7 + $0x390] sm:$0xff]
    %v403 = vld [vmem:[#allocation7 + $0x398] sm:$0xff]
    %v404 = vld [vmem:[#allocation7 + $0x3a0] sm:$0xff]
    %v405 = vld [vmem:[#allocation7 + $0x3a8] sm:$0xff]
    %v406 = vld [vmem:[#allocation7 + $0x3b0] sm:$0xff]
    %v407 = vld [vmem:[#allocation7 + $0x3b8] sm:$0xff]
    %v408 = vld [vmem:[#allocation7 + $0x3c0] sm:$0xff]
    %v409 = vld [vmem:[#allocation7 + $0x3c8] sm:$0xff]
    %v410 = vld [vmem:[#allocation7 + $0x3d0] sm:$0xff]
    %v411 = vld [vmem:[#allocation7 + $0x3d8] sm:$0xff]
    %v412 = vld [vmem:[#allocation7 + $0x3e0] sm:$0xff]
    %v413 = vld [vmem:[#allocation7 + $0x3e8] sm:$0xff]
    %v414 = vld [vmem:[#allocation7 + $0x3f0] sm:$0xff]
    %v415 = vld [vmem:[#allocation7 + $0x3f8] sm:$0xff]
    %v416 = vld [vmem:[%s4] sm:$0xf]
    %v418 = vlaneseq
    %v419 = vshrl.u32 %v418, 7
    %v420 = vsub.s32 0, %v419
    %v421 = vrot.slane %v416, %v420
    %v422 = vlaneseq
    %v423 = vshrl.u32 %v422, 7
    %v424 = vsub.s32 1, %v423
    %v425 = vrot.slane %v416, %v424
    %v426 = vlaneseq
    %v427 = vshrl.u32 %v426, 7
    %v428 = vsub.s32 2, %v427
    %v429 = vrot.slane %v416, %v428
    %v430 = vlaneseq
    %v431 = vshrl.u32 %v430, 7
    %v432 = vsub.s32 3, %v431
    %v433 = vrot.slane %v416, %v432
    %v566 = vunpack.c.l.b16 %v288
    %v567 = vunpack.c.h.b16 %v288
    %v568 = vunpack.c.l.b16 %v289
    %v569 = vunpack.c.h.b16 %v289
    %v570 = vunpack.c.l.b16 %v290
    %v571 = vunpack.c.h.b16 %v290
    %v572 = vunpack.c.l.b16 %v291
    %v573 = vunpack.c.h.b16 %v291
    %v574 = vunpack.c.l.b16 %v292
    %v575 = vunpack.c.h.b16 %v292
    %v576 = vunpack.c.l.b16 %v293
    %v577 = vunpack.c.h.b16 %v293
    %v578 = vunpack.c.l.b16 %v294
    %v579 = vunpack.c.h.b16 %v294
    %v580 = vunpack.c.l.b16 %v295
    %v581 = vunpack.c.h.b16 %v295
    %v582 = vunpack.c.l.b16 %v296
    %v583 = vunpack.c.h.b16 %v296
    %v584 = vunpack.c.l.b16 %v297
    %v585 = vunpack.c.h.b16 %v297
    %v586 = vunpack.c.l.b16 %v298
    %v587 = vunpack.c.h.b16 %v298
    %v588 = vunpack.c.l.b16 %v299
    %v589 = vunpack.c.h.b16 %v299
    %v590 = vunpack.c.l.b16 %v300
    %v591 = vunpack.c.h.b16 %v300
    %v592 = vunpack.c.l.b16 %v301
    %v593 = vunpack.c.h.b16 %v301
    %v594 = vunpack.c.l.b16 %v302
    %v595 = vunpack.c.h.b16 %v302
    %v596 = vunpack.c.l.b16 %v303
    %v597 = vunpack.c.h.b16 %v303
    %v598 = vunpack.c.l.b16 %v304
    %v599 = vunpack.c.h.b16 %v304
    %v600 = vunpack.c.l.b16 %v305
    %v601 = vunpack.c.h.b16 %v305
    %v602 = vunpack.c.l.b16 %v306
    %v603 = vunpack.c.h.b16 %v306
    %v604 = vunpack.c.l.b16 %v307
    %v605 = vunpack.c.h.b16 %v307
    %v606 = vunpack.c.l.b16 %v308
    %v607 = vunpack.c.h.b16 %v308
    %v608 = vunpack.c.l.b16 %v309
    %v609 = vunpack.c.h.b16 %v309
    %v610 = vunpack.c.l.b16 %v310
    %v611 = vunpack.c.h.b16 %v310
    %v612 = vunpack.c.l.b16 %v311
    %v613 = vunpack.c.h.b16 %v311
    %v614 = vunpack.c.l.b16 %v312
    %v615 = vunpack.c.h.b16 %v312
    %v616 = vunpack.c.l.b16 %v313
    %v617 = vunpack.c.h.b16 %v313
    %v618 = vunpack.c.l.b16 %v314
    %v619 = vunpack.c.h.b16 %v314
    %v620 = vunpack.c.l.b16 %v315
    %v621 = vunpack.c.h.b16 %v315
    %v622 = vunpack.c.l.b16 %v316
    %v623 = vunpack.c.h.b16 %v316
    %v624 = vunpack.c.l.b16 %v317
    %v625 = vunpack.c.h.b16 %v317
    %v626 = vunpack.c.l.b16 %v318
    %v627 = vunpack.c.h.b16 %v318
    %v628 = vunpack.c.l.b16 %v319
    %v629 = vunpack.c.h.b16 %v319
    %v630 = vunpack.c.l.b16 %v320
    %v631 = vunpack.c.h.b16 %v320
    %v632 = vunpack.c.l.b16 %v321
    %v633 = vunpack.c.h.b16 %v321
    %v634 = vunpack.c.l.b16 %v322
    %v635 = vunpack.c.h.b16 %v322
    %v636 = vunpack.c.l.b16 %v323
    %v637 = vunpack.c.h.b16 %v323
    %v638 = vunpack.c.l.b16 %v324
    %v639 = vunpack.c.h.b16 %v324
    %v640 = vunpack.c.l.b16 %v325
    %v641 = vunpack.c.h.b16 %v325
    %v642 = vunpack.c.l.b16 %v326
    %v643 = vunpack.c.h.b16 %v326
    %v644 = vunpack.c.l.b16 %v327
    %v645 = vunpack.c.h.b16 %v327
    %v646 = vunpack.c.l.b16 %v328
    %v647 = vunpack.c.h.b16 %v328
    %v648 = vunpack.c.l.b16 %v329
    %v649 = vunpack.c.h.b16 %v329
    %v650 = vunpack.c.l.b16 %v330
    %v651 = vunpack.c.h.b16 %v330
    %v652 = vunpack.c.l.b16 %v331
    %v653 = vunpack.c.h.b16 %v331
    %v654 = vunpack.c.l.b16 %v332
    %v655 = vunpack.c.h.b16 %v332
    %v656 = vunpack.c.l.b16 %v333
    %v657 = vunpack.c.h.b16 %v333
    %v658 = vunpack.c.l.b16 %v334
    %v659 = vunpack.c.h.b16 %v334
    %v660 = vunpack.c.l.b16 %v335
    %v661 = vunpack.c.h.b16 %v335
    %v662 = vunpack.c.l.b16 %v336
    %v663 = vunpack.c.h.b16 %v336
    %v664 = vunpack.c.l.b16 %v337
    %v665 = vunpack.c.h.b16 %v337
    %v666 = vunpack.c.l.b16 %v338
    %v667 = vunpack.c.h.b16 %v338
    %v668 = vunpack.c.l.b16 %v339
    %v669 = vunpack.c.h.b16 %v339
    %v670 = vunpack.c.l.b16 %v340
    %v671 = vunpack.c.h.b16 %v340
    %v672 = vunpack.c.l.b16 %v341
    %v673 = vunpack.c.h.b16 %v341
    %v674 = vunpack.c.l.b16 %v342
    %v675 = vunpack.c.h.b16 %v342
    %v676 = vunpack.c.l.b16 %v343
    %v677 = vunpack.c.h.b16 %v343
    %v678 = vunpack.c.l.b16 %v344
    %v679 = vunpack.c.h.b16 %v344
    %v680 = vunpack.c.l.b16 %v345
    %v681 = vunpack.c.h.b16 %v345
    %v682 = vunpack.c.l.b16 %v346
    %v683 = vunpack.c.h.b16 %v346
    %v684 = vunpack.c.l.b16 %v347
    %v685 = vunpack.c.h.b16 %v347
    %v686 = vunpack.c.l.b16 %v348
    %v687 = vunpack.c.h.b16 %v348
    %v688 = vunpack.c.l.b16 %v349
    %v689 = vunpack.c.h.b16 %v349
    %v690 = vunpack.c.l.b16 %v350
    %v691 = vunpack.c.h.b16 %v350
    %v692 = vunpack.c.l.b16 %v351
    %v693 = vunpack.c.h.b16 %v351
    %v694 = vunpack.c.l.b16 %v352
    %v695 = vunpack.c.h.b16 %v352
    %v696 = vunpack.c.l.b16 %v353
    %v697 = vunpack.c.h.b16 %v353
    %v698 = vunpack.c.l.b16 %v354
    %v699 = vunpack.c.h.b16 %v354
    %v700 = vunpack.c.l.b16 %v355
    %v701 = vunpack.c.h.b16 %v355
    %v702 = vunpack.c.l.b16 %v356
    %v703 = vunpack.c.h.b16 %v356
    %v704 = vunpack.c.l.b16 %v357
    %v705 = vunpack.c.h.b16 %v357
    %v706 = vunpack.c.l.b16 %v358
    %v707 = vunpack.c.h.b16 %v358
    %v708 = vunpack.c.l.b16 %v359
    %v709 = vunpack.c.h.b16 %v359
    %v710 = vunpack.c.l.b16 %v360
    %v711 = vunpack.c.h.b16 %v360
    %v712 = vunpack.c.l.b16 %v361
    %v713 = vunpack.c.h.b16 %v361
    %v714 = vunpack.c.l.b16 %v362
    %v715 = vunpack.c.h.b16 %v362
    %v716 = vunpack.c.l.b16 %v363
    %v717 = vunpack.c.h.b16 %v363
    %v718 = vunpack.c.l.b16 %v364
    %v719 = vunpack.c.h.b16 %v364
    %v720 = vunpack.c.l.b16 %v365
    %v721 = vunpack.c.h.b16 %v365
    %v722 = vunpack.c.l.b16 %v366
    %v723 = vunpack.c.h.b16 %v366
    %v724 = vunpack.c.l.b16 %v367
    %v725 = vunpack.c.h.b16 %v367
    %v726 = vunpack.c.l.b16 %v368
    %v727 = vunpack.c.h.b16 %v368
    %v728 = vunpack.c.l.b16 %v369
    %v729 = vunpack.c.h.b16 %v369
    %v730 = vunpack.c.l.b16 %v370
    %v731 = vunpack.c.h.b16 %v370
    %v732 = vunpack.c.l.b16 %v371
    %v733 = vunpack.c.h.b16 %v371
    %v734 = vunpack.c.l.b16 %v372
    %v735 = vunpack.c.h.b16 %v372
    %v736 = vunpack.c.l.b16 %v373
    %v737 = vunpack.c.h.b16 %v373
    %v738 = vunpack.c.l.b16 %v374
    %v739 = vunpack.c.h.b16 %v374
    %v740 = vunpack.c.l.b16 %v375
    %v741 = vunpack.c.h.b16 %v375
    %v742 = vunpack.c.l.b16 %v376
    %v743 = vunpack.c.h.b16 %v376
    %v744 = vunpack.c.l.b16 %v377
    %v745 = vunpack.c.h.b16 %v377
    %v746 = vunpack.c.l.b16 %v378
    %v747 = vunpack.c.h.b16 %v378
    %v748 = vunpack.c.l.b16 %v379
    %v749 = vunpack.c.h.b16 %v379
    %v750 = vunpack.c.l.b16 %v380
    %v751 = vunpack.c.h.b16 %v380
    %v752 = vunpack.c.l.b16 %v381
    %v753 = vunpack.c.h.b16 %v381
    %v754 = vunpack.c.l.b16 %v382
    %v755 = vunpack.c.h.b16 %v382
    %v756 = vunpack.c.l.b16 %v383
    %v757 = vunpack.c.h.b16 %v383
    %v758 = vunpack.c.l.b16 %v384
    %v759 = vunpack.c.h.b16 %v384
    %v760 = vunpack.c.l.b16 %v385
    %v761 = vunpack.c.h.b16 %v385
    %v762 = vunpack.c.l.b16 %v386
    %v763 = vunpack.c.h.b16 %v386
    %v764 = vunpack.c.l.b16 %v387
    %v765 = vunpack.c.h.b16 %v387
    %v766 = vunpack.c.l.b16 %v388
    %v767 = vunpack.c.h.b16 %v388
    %v768 = vunpack.c.l.b16 %v389
    %v769 = vunpack.c.h.b16 %v389
    %v770 = vunpack.c.l.b16 %v390
    %v771 = vunpack.c.h.b16 %v390
    %v772 = vunpack.c.l.b16 %v391
    %v773 = vunpack.c.h.b16 %v391
    %v774 = vunpack.c.l.b16 %v392
    %v775 = vunpack.c.h.b16 %v392
    %v776 = vunpack.c.l.b16 %v393
    %v777 = vunpack.c.h.b16 %v393
    %v778 = vunpack.c.l.b16 %v394
    %v779 = vunpack.c.h.b16 %v394
    %v780 = vunpack.c.l.b16 %v395
    %v781 = vunpack.c.h.b16 %v395
    %v782 = vunpack.c.l.b16 %v396
    %v783 = vunpack.c.h.b16 %v396
    %v784 = vunpack.c.l.b16 %v397
    %v785 = vunpack.c.h.b16 %v397
    %v786 = vunpack.c.l.b16 %v398
    %v787 = vunpack.c.h.b16 %v398
    %v788 = vunpack.c.l.b16 %v399
    %v789 = vunpack.c.h.b16 %v399
    %v790 = vunpack.c.l.b16 %v400
    %v791 = vunpack.c.h.b16 %v400
    %v792 = vunpack.c.l.b16 %v401
    %v793 = vunpack.c.h.b16 %v401
    %v794 = vunpack.c.l.b16 %v402
    %v795 = vunpack.c.h.b16 %v402
    %v796 = vunpack.c.l.b16 %v403
    %v797 = vunpack.c.h.b16 %v403
    %v798 = vunpack.c.l.b16 %v404
    %v799 = vunpack.c.h.b16 %v404
    %v800 = vunpack.c.l.b16 %v405
    %v801 = vunpack.c.h.b16 %v405
    %v802 = vunpack.c.l.b16 %v406
    %v803 = vunpack.c.h.b16 %v406
    %v804 = vunpack.c.l.b16 %v407
    %v805 = vunpack.c.h.b16 %v407
    %v806 = vunpack.c.l.b16 %v408
    %v807 = vunpack.c.h.b16 %v408
    %v808 = vunpack.c.l.b16 %v409
    %v809 = vunpack.c.h.b16 %v409
    %v810 = vunpack.c.l.b16 %v410
    %v811 = vunpack.c.h.b16 %v410
    %v812 = vunpack.c.l.b16 %v411
    %v813 = vunpack.c.h.b16 %v411
    %v814 = vunpack.c.l.b16 %v412
    %v815 = vunpack.c.h.b16 %v412
    %v816 = vunpack.c.l.b16 %v413
    %v817 = vunpack.c.h.b16 %v413
    %v818 = vunpack.c.l.b16 %v414
    %v819 = vunpack.c.h.b16 %v414
    %v820 = vunpack.c.l.b16 %v415
    %v821 = vunpack.c.h.b16 %v415
    %v822 = vpack.c.b16 %v570, %v566
    %v823 = vpack.c.b16 %v571, %v567
    %v824 = vpack.c.b16 %v572, %v568
    %v825 = vpack.c.b16 %v573, %v569
    %v826 = vpack.c.b16 %v578, %v574
    %v827 = vpack.c.b16 %v579, %v575
    %v828 = vpack.c.b16 %v580, %v576
    %v829 = vpack.c.b16 %v581, %v577
    %v830 = vpack.c.b16 %v586, %v582
    %v831 = vpack.c.b16 %v587, %v583
    %v832 = vpack.c.b16 %v588, %v584
    %v833 = vpack.c.b16 %v589, %v585
    %v834 = vpack.c.b16 %v594, %v590
    %v835 = vpack.c.b16 %v595, %v591
    %v836 = vpack.c.b16 %v596, %v592
    %v837 = vpack.c.b16 %v597, %v593
    %v838 = vpack.c.b16 %v602, %v598
    %v839 = vpack.c.b16 %v603, %v599
    %v840 = vpack.c.b16 %v604, %v600
    %v841 = vpack.c.b16 %v605, %v601
    %v842 = vpack.c.b16 %v610, %v606
    %v843 = vpack.c.b16 %v611, %v607
    %v844 = vpack.c.b16 %v612, %v608
    %v845 = vpack.c.b16 %v613, %v609
    %v846 = vpack.c.b16 %v618, %v614
    %v847 = vpack.c.b16 %v619, %v615
    %v848 = vpack.c.b16 %v620, %v616
    %v849 = vpack.c.b16 %v621, %v617
    %v850 = vpack.c.b16 %v626, %v622
    %v851 = vpack.c.b16 %v627, %v623
    %v852 = vpack.c.b16 %v628, %v624
    %v853 = vpack.c.b16 %v629, %v625
    %v854 = vpack.c.b16 %v634, %v630
    %v855 = vpack.c.b16 %v635, %v631
    %v856 = vpack.c.b16 %v636, %v632
    %v857 = vpack.c.b16 %v637, %v633
    %v858 = vpack.c.b16 %v642, %v638
    %v859 = vpack.c.b16 %v643, %v639
    %v860 = vpack.c.b16 %v644, %v640
    %v861 = vpack.c.b16 %v645, %v641
    %v862 = vpack.c.b16 %v650, %v646
    %v863 = vpack.c.b16 %v651, %v647
    %v864 = vpack.c.b16 %v652, %v648
    %v865 = vpack.c.b16 %v653, %v649
    %v866 = vpack.c.b16 %v658, %v654
    %v867 = vpack.c.b16 %v659, %v655
    %v868 = vpack.c.b16 %v660, %v656
    %v869 = vpack.c.b16 %v661, %v657
    %v870 = vpack.c.b16 %v666, %v662
    %v871 = vpack.c.b16 %v667, %v663
    %v872 = vpack.c.b16 %v668, %v664
    %v873 = vpack.c.b16 %v669, %v665
    %v874 = vpack.c.b16 %v674, %v670
    %v875 = vpack.c.b16 %v675, %v671
    %v876 = vpack.c.b16 %v676, %v672
    %v877 = vpack.c.b16 %v677, %v673
    %v878 = vpack.c.b16 %v682, %v678
    %v879 = vpack.c.b16 %v683, %v679
    %v880 = vpack.c.b16 %v684, %v680
    %v881 = vpack.c.b16 %v685, %v681
    %v882 = vpack.c.b16 %v690, %v686
    %v883 = vpack.c.b16 %v691, %v687
    %v884 = vpack.c.b16 %v692, %v688
    %v885 = vpack.c.b16 %v693, %v689
    %v886 = vpack.c.b16 %v698, %v694
    %v887 = vpack.c.b16 %v699, %v695
    %v888 = vpack.c.b16 %v700, %v696
    %v889 = vpack.c.b16 %v701, %v697
    %v890 = vpack.c.b16 %v706, %v702
    %v891 = vpack.c.b16 %v707, %v703
    %v892 = vpack.c.b16 %v708, %v704
    %v893 = vpack.c.b16 %v709, %v705
    %v894 = vpack.c.b16 %v714, %v710
    %v895 = vpack.c.b16 %v715, %v711
    %v896 = vpack.c.b16 %v716, %v712
    %v897 = vpack.c.b16 %v717, %v713
    %v898 = vpack.c.b16 %v722, %v718
    %v899 = vpack.c.b16 %v723, %v719
    %v900 = vpack.c.b16 %v724, %v720
    %v901 = vpack.c.b16 %v725, %v721
    %v902 = vpack.c.b16 %v730, %v726
    %v903 = vpack.c.b16 %v731, %v727
    %v904 = vpack.c.b16 %v732, %v728
    %v905 = vpack.c.b16 %v733, %v729
    %v906 = vpack.c.b16 %v738, %v734
    %v907 = vpack.c.b16 %v739, %v735
    %v908 = vpack.c.b16 %v740, %v736
    %v909 = vpack.c.b16 %v741, %v737
    %v910 = vpack.c.b16 %v746, %v742
    %v911 = vpack.c.b16 %v747, %v743
    %v912 = vpack.c.b16 %v748, %v744
    %v913 = vpack.c.b16 %v749, %v745
    %v914 = vpack.c.b16 %v754, %v750
    %v915 = vpack.c.b16 %v755, %v751
    %v916 = vpack.c.b16 %v756, %v752
    %v917 = vpack.c.b16 %v757, %v753
    %v918 = vpack.c.b16 %v762, %v758
    %v919 = vpack.c.b16 %v763, %v759
    %v920 = vpack.c.b16 %v764, %v760
    %v921 = vpack.c.b16 %v765, %v761
    %v922 = vpack.c.b16 %v770, %v766
    %v923 = vpack.c.b16 %v771, %v767
    %v924 = vpack.c.b16 %v772, %v768
    %v925 = vpack.c.b16 %v773, %v769
    %v926 = vpack.c.b16 %v778, %v774
    %v927 = vpack.c.b16 %v779, %v775
    %v928 = vpack.c.b16 %v780, %v776
    %v929 = vpack.c.b16 %v781, %v777
    %v930 = vpack.c.b16 %v786, %v782
    %v931 = vpack.c.b16 %v787, %v783
    %v932 = vpack.c.b16 %v788, %v784
    %v933 = vpack.c.b16 %v789, %v785
    %v934 = vpack.c.b16 %v794, %v790
    %v935 = vpack.c.b16 %v795, %v791
    %v936 = vpack.c.b16 %v796, %v792
    %v937 = vpack.c.b16 %v797, %v793
    %v938 = vpack.c.b16 %v802, %v798
    %v939 = vpack.c.b16 %v803, %v799
    %v940 = vpack.c.b16 %v804, %v800
    %v941 = vpack.c.b16 %v805, %v801
    %v942 = vpack.c.b16 %v810, %v806
    %v943 = vpack.c.b16 %v811, %v807
    %v944 = vpack.c.b16 %v812, %v808
    %v945 = vpack.c.b16 %v813, %v809
    %v946 = vpack.c.b16 %v818, %v814
    %v947 = vpack.c.b16 %v819, %v815
    %v948 = vpack.c.b16 %v820, %v816
    %v949 = vpack.c.b16 %v821, %v817
    %1078 = vmatprep.subr.bf16.mxu0 %v823
    %1079 = vmatpush1.bf16.msra.mxu0 %v822
    %1080 = vmatprep.subr.bf16.mxu0 %v827
    %1081 = vmatpush1.bf16.msra.mxu0 %v826
    %1082 = vmatprep.subr.bf16.mxu0 %v831
    %1083 = vmatpush1.bf16.msra.mxu0 %v830
    %1084 = vmatprep.subr.bf16.mxu0 %v835
    %1085 = vmatpush1.bf16.msra.mxu0 %v834
    %1086 = vmatprep.subr.bf16.mxu0 %v839
    %1087 = vmatpush1.bf16.msra.mxu0 %v838
    %1088 = vmatprep.subr.bf16.mxu0 %v843
    %1089 = vmatpush1.bf16.msra.mxu0 %v842
    %1090 = vmatprep.subr.bf16.mxu0 %v847
    %1091 = vmatpush1.bf16.msra.mxu0 %v846
    %1092 = vmatprep.subr.bf16.mxu0 %v851
    %1093 = vmatpush1.bf16.msra.mxu0 %v850
    %1094 = vmatprep.subr.bf16.mxu0 %v855
    %1095 = vmatpush1.bf16.msra.mxu0 %v854
    %1096 = vmatprep.subr.bf16.mxu0 %v859
    %1097 = vmatpush1.bf16.msra.mxu0 %v858
    %1098 = vmatprep.subr.bf16.mxu0 %v863
    %1099 = vmatpush1.bf16.msra.mxu0 %v862
    %1100 = vmatprep.subr.bf16.mxu0 %v867
    %1101 = vmatpush1.bf16.msra.mxu0 %v866
    %1102 = vmatprep.subr.bf16.mxu0 %v871
    %1103 = vmatpush1.bf16.msra.mxu0 %v870
    %1104 = vmatprep.subr.bf16.mxu0 %v875
    %1105 = vmatpush1.bf16.msra.mxu0 %v874
    %1106 = vmatprep.subr.bf16.mxu0 %v879
    %1107 = vmatpush1.bf16.msra.mxu0 %v878
    %1108 = vmatprep.subr.bf16.mxu0 %v883
    %1109 = vmatpush1.bf16.msra.mxu0 %v882
    %1110 = vmatprep.mubr.bf16.mxu0 %v285
    %1111 = vmatmul.mubr.bf16.gmra.mrb[0].mxu0 %v284
    %v1112 = vpop.f32.mrb[0].mxu0
    %v1113 = vadd.f32 %v421, %v1112
    %v1114 = vpop.f32.mrb[0].mxu0
    %v1115 = vadd.f32 %v425, %v1114
    %v1116 = vpop.f32.mrb[0].mxu0
    %v1117 = vadd.f32 %v421, %v1116
    %v1118 = vpop.f32.mrb[0].mxu0
    %v1119 = vadd.f32 %v425, %v1118
    %1120 = vdwg.mxu0
    %1121 = vmatprep.subr.bf16.mxu0 %v887
    %1122 = vmatpush1.bf16.msra.mxu0 %v886
    %1123 = vmatprep.subr.bf16.mxu0 %v891
    %1124 = vmatpush1.bf16.msra.mxu0 %v890
    %1125 = vmatprep.subr.bf16.mxu0 %v895
    %1126 = vmatpush1.bf16.msra.mxu0 %v894
    %1127 = vmatprep.subr.bf16.mxu0 %v899
    %1128 = vmatpush1.bf16.msra.mxu0 %v898
    %1129 = vmatprep.subr.bf16.mxu0 %v903
    %1130 = vmatpush1.bf16.msra.mxu0 %v902
    %1131 = vmatprep.subr.bf16.mxu0 %v907
    %1132 = vmatpush1.bf16.msra.mxu0 %v906
    %1133 = vmatprep.subr.bf16.mxu0 %v911
    %1134 = vmatpush1.bf16.msra.mxu0 %v910
    %1135 = vmatprep.subr.bf16.mxu0 %v915
    %1136 = vmatpush1.bf16.msra.mxu0 %v914
    %1137 = vmatprep.subr.bf16.mxu0 %v919
    %1138 = vmatpush1.bf16.msra.mxu0 %v918
    %1139 = vmatprep.subr.bf16.mxu0 %v923
    %1140 = vmatpush1.bf16.msra.mxu0 %v922
    %1141 = vmatprep.subr.bf16.mxu0 %v927
    %1142 = vmatpush1.bf16.msra.mxu0 %v926
    %1143 = vmatprep.subr.bf16.mxu0 %v931
    %1144 = vmatpush1.bf16.msra.mxu0 %v930
    %1145 = vmatprep.subr.bf16.mxu0 %v935
    %1146 = vmatpush1.bf16.msra.mxu0 %v934
    %1147 = vmatprep.subr.bf16.mxu0 %v939
    %1148 = vmatpush1.bf16.msra.mxu0 %v938
    %1149 = vmatprep.subr.bf16.mxu0 %v943
    %1150 = vmatpush1.bf16.msra.mxu0 %v942
    %1151 = vmatprep.subr.bf16.mxu0 %v947
    %1152 = vmatpush1.bf16.msra.mxu0 %v946
    %1153 = vmatprep.mubr.bf16.mxu0 %v287
    %1154 = vmatmul.mubr.bf16.gmra.mrb[0].mxu0 %v286
    %v1155 = vpop.f32.mrb[0].mxu0
    %v1156 = vadd.f32 %v1113, %v1155
    %v1157 = vpop.f32.mrb[0].mxu0
    %v1158 = vadd.f32 %v1115, %v1157
    %v1159 = vpop.f32.mrb[0].mxu0
    %v1160 = vadd.f32 %v1117, %v1159
    %v1161 = vpop.f32.mrb[0].mxu0
    %v1162 = vadd.f32 %v1119, %v1161
    %1163 = vdwg.mxu0
    %1164 = vmatprep.subr.bf16.mxu0 %v825
    %1165 = vmatpush1.bf16.msra.mxu0 %v824
    %1166 = vmatprep.subr.bf16.mxu0 %v829
    %1167 = vmatpush1.bf16.msra.mxu0 %v828
    %1168 = vmatprep.subr.bf16.mxu0 %v833
    %1169 = vmatpush1.bf16.msra.mxu0 %v832
    %1170 = vmatprep.subr.bf16.mxu0 %v837
    %1171 = vmatpush1.bf16.msra.mxu0 %v836
    %1172 = vmatprep.subr.bf16.mxu0 %v841
    %1173 = vmatpush1.bf16.msra.mxu0 %v840
    %1174 = vmatprep.subr.bf16.mxu0 %v845
    %1175 = vmatpush1.bf16.msra.mxu0 %v844
    %1176 = vmatprep.subr.bf16.mxu0 %v849
    %1177 = vmatpush1.bf16.msra.mxu0 %v848
    %1178 = vmatprep.subr.bf16.mxu0 %v853
    %1179 = vmatpush1.bf16.msra.mxu0 %v852
    %1180 = vmatprep.subr.bf16.mxu0 %v857
    %1181 = vmatpush1.bf16.msra.mxu0 %v856
    %1182 = vmatprep.subr.bf16.mxu0 %v861
    %1183 = vmatpush1.bf16.msra.mxu0 %v860
    %1184 = vmatprep.subr.bf16.mxu0 %v865
    %1185 = vmatpush1.bf16.msra.mxu0 %v864
    %1186 = vmatprep.subr.bf16.mxu0 %v869
    %1187 = vmatpush1.bf16.msra.mxu0 %v868
    %1188 = vmatprep.subr.bf16.mxu0 %v873
    %1189 = vmatpush1.bf16.msra.mxu0 %v872
    %1190 = vmatprep.subr.bf16.mxu0 %v877
    %1191 = vmatpush1.bf16.msra.mxu0 %v876
    %1192 = vmatprep.subr.bf16.mxu0 %v881
    %1193 = vmatpush1.bf16.msra.mxu0 %v880
    %1194 = vmatprep.subr.bf16.mxu0 %v885
    %1195 = vmatpush1.bf16.msra.mxu0 %v884
    %1196 = vmatprep.mubr.bf16.mxu0 %v285
    %1197 = vmatmul.mubr.bf16.gmra.mrb[0].mxu0 %v284
    %v1198 = vpop.f32.mrb[0].mxu0
    %v1199 = vadd.f32 %v429, %v1198
    %v1200 = vpop.f32.mrb[0].mxu0
    %v1201 = vadd.f32 %v433, %v1200
    %v1202 = vpop.f32.mrb[0].mxu0
    %v1203 = vadd.f32 %v429, %v1202
    %v1204 = vpop.f32.mrb[0].mxu0
    %v1205 = vadd.f32 %v433, %v1204
    %1206 = vdwg.mxu0
    %1207 = vmatprep.subr.bf16.mxu0 %v889
    %1208 = vmatpush1.bf16.msra.mxu0 %v888
    %1209 = vmatprep.subr.bf16.mxu0 %v893
    %1210 = vmatpush1.bf16.msra.mxu0 %v892
    %1211 = vmatprep.subr.bf16.mxu0 %v897
    %1212 = vmatpush1.bf16.msra.mxu0 %v896
    %1213 = vmatprep.subr.bf16.mxu0 %v901
    %1214 = vmatpush1.bf16.msra.mxu0 %v900
    %1215 = vmatprep.subr.bf16.mxu0 %v905
    %1216 = vmatpush1.bf16.msra.mxu0 %v904
    %1217 = vmatprep.subr.bf16.mxu0 %v909
    %1218 = vmatpush1.bf16.msra.mxu0 %v908
    %1219 = vmatprep.subr.bf16.mxu0 %v913
    %1220 = vmatpush1.bf16.msra.mxu0 %v912
    %1221 = vmatprep.subr.bf16.mxu0 %v917
    %1222 = vmatpush1.bf16.msra.mxu0 %v916
    %1223 = vmatprep.subr.bf16.mxu0 %v921
    %1224 = vmatpush1.bf16.msra.mxu0 %v920
    %1225 = vmatprep.subr.bf16.mxu0 %v925
    %1226 = vmatpush1.bf16.msra.mxu0 %v924
    %1227 = vmatprep.subr.bf16.mxu0 %v929
    %1228 = vmatpush1.bf16.msra.mxu0 %v928
    %1229 = vmatprep.subr.bf16.mxu0 %v933
    %1230 = vmatpush1.bf16.msra.mxu0 %v932
    %1231 = vmatprep.subr.bf16.mxu0 %v937
    %1232 = vmatpush1.bf16.msra.mxu0 %v936
    %1233 = vmatprep.subr.bf16.mxu0 %v941
    %1234 = vmatpush1.bf16.msra.mxu0 %v940
    %1235 = vmatprep.subr.bf16.mxu0 %v945
    %1236 = vmatpush1.bf16.msra.mxu0 %v944
    %1237 = vmatprep.subr.bf16.mxu0 %v949
    %1238 = vmatpush1.bf16.msra.mxu0 %v948
    %1239 = vmatprep.mubr.bf16.mxu0 %v287
    %1240 = vmatmul.mubr.bf16.gmra.mrb[0].mxu0 %v286
    %v1241 = vpop.f32.mrb[0].mxu0
    %v1242 = vadd.f32 %v1199, %v1241
    %v1243 = vpop.f32.mrb[0].mxu0
    %v1244 = vadd.f32 %v1201, %v1243
    %v1245 = vpop.f32.mrb[0].mxu0
    %v1246 = vadd.f32 %v1203, %v1245
    %v1247 = vpop.f32.mrb[0].mxu0
    %v1248 = vadd.f32 %v1205, %v1247
    %1249 = vdwg.mxu0
    %v1250 = vmax.f32 %v1156, 0.0
    %v1251 = vmax.f32 %v1158, 0.0
    %v1252 = vmax.f32 %v1242, 0.0
    %v1253 = vmax.f32 %v1244, 0.0
    %v1254 = vmax.f32 %v1160, 0.0
    %v1255 = vmax.f32 %v1162, 0.0
    %v1256 = vmax.f32 %v1246, 0.0
    %v1257 = vmax.f32 %v1248, 0.0
    %v1258 = vpack.c.bf16 %v1254, %v1250
    %v1259 = vpack.c.bf16 %v1255, %v1251
    %v1260 = vpack.c.bf16 %v1256, %v1252
    %v1261 = vpack.c.bf16 %v1257, %v1253
    %v1262 = vld [vmem:[#allocation9] sm:$0xf]
    %v1263 = vld [vmem:[#allocation9 + $0x4] sm:$0xf]
    %v1264 = vld [vmem:[#allocation9 + $0x8] sm:$0xf]
    %v1265 = vld [vmem:[#allocation9 + $0xc] sm:$0xf]
    %v1266 = vld [vmem:[#allocation9 + $0x10] sm:$0xf]
    %v1267 = vld [vmem:[#allocation9 + $0x14] sm:$0xf]
    %v1268 = vld [vmem:[#allocation9 + $0x18] sm:$0xf]
    %v1269 = vld [vmem:[#allocation9 + $0x1c] sm:$0xf]
    %v1270 = vld [vmem:[#allocation9 + $0x20] sm:$0xf]
    %v1271 = vld [vmem:[#allocation9 + $0x24] sm:$0xf]
    %v1272 = vld [vmem:[#allocation9 + $0x28] sm:$0xf]
    %v1273 = vld [vmem:[#allocation9 + $0x2c] sm:$0xf]
    %v1274 = vld [vmem:[#allocation9 + $0x30] sm:$0xf]
    %v1275 = vld [vmem:[#allocation9 + $0x34] sm:$0xf]
    %v1276 = vld [vmem:[#allocation9 + $0x38] sm:$0xf]
    %v1277 = vld [vmem:[#allocation9 + $0x3c] sm:$0xf]
    %v1278 = vld [vmem:[#allocation9 + $0x40] sm:$0xf]
    %v1279 = vld [vmem:[#allocation9 + $0x44] sm:$0xf]
    %v1280 = vld [vmem:[#allocation9 + $0x48] sm:$0xf]
    %v1281 = vld [vmem:[#allocation9 + $0x4c] sm:$0xf]
    %v1282 = vld [vmem:[#allocation9 + $0x50] sm:$0xf]
    %v1283 = vld [vmem:[#allocation9 + $0x54] sm:$0xf]
    %v1284 = vld [vmem:[#allocation9 + $0x58] sm:$0xf]
    %v1285 = vld [vmem:[#allocation9 + $0x5c] sm:$0xf]
    %v1286 = vld [vmem:[#allocation9 + $0x60] sm:$0xf]
    %v1287 = vld [vmem:[#allocation9 + $0x64] sm:$0xf]
    %v1288 = vld [vmem:[#allocation9 + $0x68] sm:$0xf]
    %v1289 = vld [vmem:[#allocation9 + $0x6c] sm:$0xf]
    %v1290 = vld [vmem:[#allocation9 + $0x70] sm:$0xf]
    %v1291 = vld [vmem:[#allocation9 + $0x74] sm:$0xf]
    %v1292 = vld [vmem:[#allocation9 + $0x78] sm:$0xf]
    %v1293 = vld [vmem:[#allocation9 + $0x7c] sm:$0xf]
    %v1294 = vld [vmem:[#allocation9 + $0x80] sm:$0xf]
    %v1295 = vld [vmem:[#allocation9 + $0x84] sm:$0xf]
    %v1296 = vld [vmem:[#allocation9 + $0x88] sm:$0xf]
    %v1297 = vld [vmem:[#allocation9 + $0x8c] sm:$0xf]
    %v1298 = vld [vmem:[#allocation9 + $0x90] sm:$0xf]
    %v1299 = vld [vmem:[#allocation9 + $0x94] sm:$0xf]
    %v1300 = vld [vmem:[#allocation9 + $0x98] sm:$0xf]
    %v1301 = vld [vmem:[#allocation9 + $0x9c] sm:$0xf]
    %v1302 = vld [vmem:[#allocation9 + $0xa0] sm:$0xf]
    %v1303 = vld [vmem:[#allocation9 + $0xa4] sm:$0xf]
    %v1304 = vld [vmem:[#allocation9 + $0xa8] sm:$0xf]
    %v1305 = vld [vmem:[#allocation9 + $0xac] sm:$0xf]
    %v1306 = vld [vmem:[#allocation9 + $0xb0] sm:$0xf]
    %v1307 = vld [vmem:[#allocation9 + $0xb4] sm:$0xf]
    %v1308 = vld [vmem:[#allocation9 + $0xb8] sm:$0xf]
    %v1309 = vld [vmem:[#allocation9 + $0xbc] sm:$0xf]
    %v1310 = vld [vmem:[#allocation9 + $0xc0] sm:$0xf]
    %v1311 = vld [vmem:[#allocation9 + $0xc4] sm:$0xf]
    %v1312 = vld [vmem:[#allocation9 + $0xc8] sm:$0xf]
    %v1313 = vld [vmem:[#allocation9 + $0xcc] sm:$0xf]
    %v1314 = vld [vmem:[#allocation9 + $0xd0] sm:$0xf]
    %v1315 = vld [vmem:[#allocation9 + $0xd4] sm:$0xf]
    %v1316 = vld [vmem:[#allocation9 + $0xd8] sm:$0xf]
    %v1317 = vld [vmem:[#allocation9 + $0xdc] sm:$0xf]
    %v1318 = vld [vmem:[#allocation9 + $0xe0] sm:$0xf]
    %v1319 = vld [vmem:[#allocation9 + $0xe4] sm:$0xf]
    %v1320 = vld [vmem:[#allocation9 + $0xe8] sm:$0xf]
    %v1321 = vld [vmem:[#allocation9 + $0xec] sm:$0xf]
    %v1322 = vld [vmem:[#allocation9 + $0xf0] sm:$0xf]
    %v1323 = vld [vmem:[#allocation9 + $0xf4] sm:$0xf]
    %v1324 = vld [vmem:[#allocation9 + $0xf8] sm:$0xf]
    %v1325 = vld [vmem:[#allocation9 + $0xfc] sm:$0xf]
    %v1326 = vld [vmem:[%s6] sm:$0x1]
    %v1328 = vlaneseq
    %v1329 = vshrl.u32 %v1328, 7
    %v1330 = vsub.s32 0, %v1329
    %v1331 = vrot.slane %v1326, %v1330
    %v1397 = vunpack.c.l.b16 %v1262
    %v1398 = vunpack.c.l.b16 %v1263
    %v1399 = vunpack.c.l.b16 %v1264
    %v1400 = vunpack.c.l.b16 %v1265
    %v1401 = vunpack.c.l.b16 %v1266
    %v1402 = vunpack.c.l.b16 %v1267
    %v1403 = vunpack.c.l.b16 %v1268
    %v1404 = vunpack.c.l.b16 %v1269
    %v1405 = vunpack.c.l.b16 %v1270
    %v1406 = vunpack.c.l.b16 %v1271
    %v1407 = vunpack.c.l.b16 %v1272
    %v1408 = vunpack.c.l.b16 %v1273
    %v1409 = vunpack.c.l.b16 %v1274
    %v1410 = vunpack.c.l.b16 %v1275
    %v1411 = vunpack.c.l.b16 %v1276
    %v1412 = vunpack.c.l.b16 %v1277
    %v1413 = vunpack.c.l.b16 %v1278
    %v1414 = vunpack.c.l.b16 %v1279
    %v1415 = vunpack.c.l.b16 %v1280
    %v1416 = vunpack.c.l.b16 %v1281
    %v1417 = vunpack.c.l.b16 %v1282
    %v1418 = vunpack.c.l.b16 %v1283
    %v1419 = vunpack.c.l.b16 %v1284
    %v1420 = vunpack.c.l.b16 %v1285
    %v1421 = vunpack.c.l.b16 %v1286
    %v1422 = vunpack.c.l.b16 %v1287
    %v1423 = vunpack.c.l.b16 %v1288
    %v1424 = vunpack.c.l.b16 %v1289
    %v1425 = vunpack.c.l.b16 %v1290
    %v1426 = vunpack.c.l.b16 %v1291
    %v1427 = vunpack.c.l.b16 %v1292
    %v1428 = vunpack.c.l.b16 %v1293
    %v1429 = vunpack.c.l.b16 %v1294
    %v1430 = vunpack.c.l.b16 %v1295
    %v1431 = vunpack.c.l.b16 %v1296
    %v1432 = vunpack.c.l.b16 %v1297
    %v1433 = vunpack.c.l.b16 %v1298
    %v1434 = vunpack.c.l.b16 %v1299
    %v1435 = vunpack.c.l.b16 %v1300
    %v1436 = vunpack.c.l.b16 %v1301
    %v1437 = vunpack.c.l.b16 %v1302
    %v1438 = vunpack.c.l.b16 %v1303
    %v1439 = vunpack.c.l.b16 %v1304
    %v1440 = vunpack.c.l.b16 %v1305
    %v1441 = vunpack.c.l.b16 %v1306
    %v1442 = vunpack.c.l.b16 %v1307
    %v1443 = vunpack.c.l.b16 %v1308
    %v1444 = vunpack.c.l.b16 %v1309
    %v1445 = vunpack.c.l.b16 %v1310
    %v1446 = vunpack.c.l.b16 %v1311
    %v1447 = vunpack.c.l.b16 %v1312
    %v1448 = vunpack.c.l.b16 %v1313
    %v1449 = vunpack.c.l.b16 %v1314
    %v1450 = vunpack.c.l.b16 %v1315
    %v1451 = vunpack.c.l.b16 %v1316
    %v1452 = vunpack.c.l.b16 %v1317
    %v1453 = vunpack.c.l.b16 %v1318
    %v1454 = vunpack.c.l.b16 %v1319
    %v1455 = vunpack.c.l.b16 %v1320
    %v1456 = vunpack.c.l.b16 %v1321
    %v1457 = vunpack.c.l.b16 %v1322
    %v1458 = vunpack.c.l.b16 %v1323
    %v1459 = vunpack.c.l.b16 %v1324
    %v1460 = vunpack.c.l.b16 %v1325
    %v1461 = vpack.c.b16 %v1398, %v1397
    %v1462 = vpack.c.b16 %v1400, %v1399
    %v1463 = vpack.c.b16 %v1402, %v1401
    %v1464 = vpack.c.b16 %v1404, %v1403
    %v1465 = vpack.c.b16 %v1406, %v1405
    %v1466 = vpack.c.b16 %v1408, %v1407
    %v1467 = vpack.c.b16 %v1410, %v1409
    %v1468 = vpack.c.b16 %v1412, %v1411
    %v1469 = vpack.c.b16 %v1414, %v1413
    %v1470 = vpack.c.b16 %v1416, %v1415
    %v1471 = vpack.c.b16 %v1418, %v1417
    %v1472 = vpack.c.b16 %v1420, %v1419
    %v1473 = vpack.c.b16 %v1422, %v1421
    %v1474 = vpack.c.b16 %v1424, %v1423
    %v1475 = vpack.c.b16 %v1426, %v1425
    %v1476 = vpack.c.b16 %v1428, %v1427
    %v1477 = vpack.c.b16 %v1430, %v1429
    %v1478 = vpack.c.b16 %v1432, %v1431
    %v1479 = vpack.c.b16 %v1434, %v1433
    %v1480 = vpack.c.b16 %v1436, %v1435
    %v1481 = vpack.c.b16 %v1438, %v1437
    %v1482 = vpack.c.b16 %v1440, %v1439
    %v1483 = vpack.c.b16 %v1442, %v1441
    %v1484 = vpack.c.b16 %v1444, %v1443
    %v1485 = vpack.c.b16 %v1446, %v1445
    %v1486 = vpack.c.b16 %v1448, %v1447
    %v1487 = vpack.c.b16 %v1450, %v1449
    %v1488 = vpack.c.b16 %v1452, %v1451
    %v1489 = vpack.c.b16 %v1454, %v1453
    %v1490 = vpack.c.b16 %v1456, %v1455
    %v1491 = vpack.c.b16 %v1458, %v1457
    %v1492 = vpack.c.b16 %v1460, %v1459
    %1525 = vmatprep.subr.bf16.mxu0 0
    %1526 = vmatpush1.bf16.msra.mxu0 %v1461
    %1527 = vmatprep.subr.bf16.mxu0 0
    %1528 = vmatpush1.bf16.msra.mxu0 %v1462
    %1529 = vmatprep.subr.bf16.mxu0 0
    %1530 = vmatpush1.bf16.msra.mxu0 %v1463
    %1531 = vmatprep.subr.bf16.mxu0 0
    %1532 = vmatpush1.bf16.msra.mxu0 %v1464
    %1533 = vmatprep.subr.bf16.mxu0 0
    %1534 = vmatpush1.bf16.msra.mxu0 %v1465
    %1535 = vmatprep.subr.bf16.mxu0 0
    %1536 = vmatpush1.bf16.msra.mxu0 %v1466
    %1537 = vmatprep.subr.bf16.mxu0 0
    %1538 = vmatpush1.bf16.msra.mxu0 %v1467
    %1539 = vmatprep.subr.bf16.mxu0 0
    %1540 = vmatpush1.bf16.msra.mxu0 %v1468
    %1541 = vmatprep.subr.bf16.mxu0 0
    %1542 = vmatpush1.bf16.msra.mxu0 %v1469
    %1543 = vmatprep.subr.bf16.mxu0 0
    %1544 = vmatpush1.bf16.msra.mxu0 %v1470
    %1545 = vmatprep.subr.bf16.mxu0 0
    %1546 = vmatpush1.bf16.msra.mxu0 %v1471
    %1547 = vmatprep.subr.bf16.mxu0 0
    %1548 = vmatpush1.bf16.msra.mxu0 %v1472
    %1549 = vmatprep.subr.bf16.mxu0 0
    %1550 = vmatpush1.bf16.msra.mxu0 %v1473
    %1551 = vmatprep.subr.bf16.mxu0 0
    %1552 = vmatpush1.bf16.msra.mxu0 %v1474
    %1553 = vmatprep.subr.bf16.mxu0 0
    %1554 = vmatpush1.bf16.msra.mxu0 %v1475
    %1555 = vmatprep.subr.bf16.mxu0 0
    %1556 = vmatpush1.bf16.msra.mxu0 %v1476
    %1557 = vmatprep.mubr.bf16.mxu0 %v1259
    %1558 = vmatmul.mubr.bf16.gmra.mrb[0].mxu0 %v1258
    %v1559 = vpop.f32.mrb[0].mxu0
    %v1560 = vadd.f32 %v1331, %v1559
    %v1561 = vpop.f32.mrb[0].mxu0
    %v1562 = vpop.f32.mrb[0].mxu0
    %v1563 = vadd.f32 %v1331, %v1562
    %v1564 = vpop.f32.mrb[0].mxu0
    %1565 = vdwg.mxu0
    %1566 = vmatprep.subr.bf16.mxu0 0
    %1567 = vmatpush1.bf16.msra.mxu0 %v1477
    %1568 = vmatprep.subr.bf16.mxu0 0
    %1569 = vmatpush1.bf16.msra.mxu0 %v1478
    %1570 = vmatprep.subr.bf16.mxu0 0
    %1571 = vmatpush1.bf16.msra.mxu0 %v1479
    %1572 = vmatprep.subr.bf16.mxu0 0
    %1573 = vmatpush1.bf16.msra.mxu0 %v1480
    %1574 = vmatprep.subr.bf16.mxu0 0
    %1575 = vmatpush1.bf16.msra.mxu0 %v1481
    %1576 = vmatprep.subr.bf16.mxu0 0
    %1577 = vmatpush1.bf16.msra.mxu0 %v1482
    %1578 = vmatprep.subr.bf16.mxu0 0
    %1579 = vmatpush1.bf16.msra.mxu0 %v1483
    %1580 = vmatprep.subr.bf16.mxu0 0
    %1581 = vmatpush1.bf16.msra.mxu0 %v1484
    %1582 = vmatprep.subr.bf16.mxu0 0
    %1583 = vmatpush1.bf16.msra.mxu0 %v1485
    %1584 = vmatprep.subr.bf16.mxu0 0
    %1585 = vmatpush1.bf16.msra.mxu0 %v1486
    %1586 = vmatprep.subr.bf16.mxu0 0
    %1587 = vmatpush1.bf16.msra.mxu0 %v1487
    %1588 = vmatprep.subr.bf16.mxu0 0
    %1589 = vmatpush1.bf16.msra.mxu0 %v1488
    %1590 = vmatprep.subr.bf16.mxu0 0
    %1591 = vmatpush1.bf16.msra.mxu0 %v1489
    %1592 = vmatprep.subr.bf16.mxu0 0
    %1593 = vmatpush1.bf16.msra.mxu0 %v1490
    %1594 = vmatprep.subr.bf16.mxu0 0
    %1595 = vmatpush1.bf16.msra.mxu0 %v1491
    %1596 = vmatprep.subr.bf16.mxu0 0
    %1597 = vmatpush1.bf16.msra.mxu0 %v1492
    %1598 = vmatprep.mubr.bf16.mxu0 %v1261
    %1599 = vmatmul.mubr.bf16.gmra.mrb[0].mxu0 %v1260
    %v1600 = vpop.f32.mrb[0].mxu0
    %v1601 = vadd.f32 %v1560, %v1600
    %v1602 = vpop.f32.mrb[0].mxu0
    %v1603 = vpop.f32.mrb[0].mxu0
    %v1604 = vadd.f32 %v1563, %v1603
    %v1605 = vpop.f32.mrb[0].mxu0
    %1606 = vdwg.mxu0
    %v1607 = vmax.f32 %v1601, 0.0
    %v1608 = vmax.f32 %v1604, 0.0
    %v1609 = vpack.c.bf16 %v1608, %v1607
    %v1610 = vld [vmem:[#allocation10] sm:$0xf]
    %v1611 = vld [vmem:[#allocation10 + $0x4] sm:$0xf]
    %v1612 = vld [vmem:[#allocation10 + $0x8] sm:$0xf]
    %v1613 = vld [vmem:[#allocation10 + $0xc] sm:$0xf]
    %v1614 = vld [vmem:[#allocation10 + $0x10] sm:$0xf]
    %v1615 = vld [vmem:[#allocation10 + $0x14] sm:$0xf]
    %v1616 = vld [vmem:[#allocation10 + $0x18] sm:$0xf]
    %v1617 = vld [vmem:[#allocation10 + $0x1c] sm:$0xf]
    %v1618 = vld [vmem:[#allocation10 + $0x20] sm:$0xf]
    %v1619 = vld [vmem:[#allocation10 + $0x24] sm:$0xf]
    %v1620 = vld [vmem:[#allocation10 + $0x28] sm:$0xf]
    %v1621 = vld [vmem:[#allocation10 + $0x2c] sm:$0xf]
    %v1622 = vld [vmem:[#allocation10 + $0x30] sm:$0xf]
    %v1623 = vld [vmem:[#allocation10 + $0x34] sm:$0xf]
    %v1624 = vld [vmem:[#allocation10 + $0x38] sm:$0xf]
    %v1625 = vld [vmem:[#allocation10 + $0x3c] sm:$0xf]
    %v1626 = vld [vmem:[%s8] sm:$0x1]
    %v1628 = vlaneseq
    %v1629 = vshrl.u32 %v1628, 7
    %v1630 = vsub.s32 0, %v1629
    %v1631 = vrot.slane %v1626, %v1630
    %v1649 = vunpack.c.l.b16 %v1610
    %v1650 = vunpack.c.l.b16 %v1611
    %v1651 = vunpack.c.l.b16 %v1612
    %v1652 = vunpack.c.l.b16 %v1613
    %v1653 = vunpack.c.l.b16 %v1614
    %v1654 = vunpack.c.l.b16 %v1615
    %v1655 = vunpack.c.l.b16 %v1616
    %v1656 = vunpack.c.l.b16 %v1617
    %v1657 = vunpack.c.l.b16 %v1618
    %v1658 = vunpack.c.l.b16 %v1619
    %v1659 = vunpack.c.l.b16 %v1620
    %v1660 = vunpack.c.l.b16 %v1621
    %v1661 = vunpack.c.l.b16 %v1622
    %v1662 = vunpack.c.l.b16 %v1623
    %v1663 = vunpack.c.l.b16 %v1624
    %v1664 = vunpack.c.l.b16 %v1625
    %v1665 = vpack.c.b16 %v1650, %v1649
    %v1666 = vpack.c.b16 %v1652, %v1651
    %v1667 = vpack.c.b16 %v1654, %v1653
    %v1668 = vpack.c.b16 %v1656, %v1655
    %v1669 = vpack.c.b16 %v1658, %v1657
    %v1670 = vpack.c.b16 %v1660, %v1659
    %v1671 = vpack.c.b16 %v1662, %v1661
    %v1672 = vpack.c.b16 %v1664, %v1663
    %1681 = vmatprep.subr.bf16.mxu0 0
    %1682 = vmatpush1.bf16.msra.mxu0 %v1665
    %1683 = vmatprep.subr.bf16.mxu0 0
    %1684 = vmatpush1.bf16.msra.mxu0 %v1666
    %1685 = vmatprep.subr.bf16.mxu0 0
    %1686 = vmatpush1.bf16.msra.mxu0 %v1667
    %1687 = vmatprep.subr.bf16.mxu0 0
    %1688 = vmatpush1.bf16.msra.mxu0 %v1668
    %1689 = vmatprep.subr.bf16.mxu0 0
    %1690 = vmatpush1.bf16.msra.mxu0 %v1669
    %1691 = vmatprep.subr.bf16.mxu0 0
    %1692 = vmatpush1.bf16.msra.mxu0 %v1670
    %1693 = vmatprep.subr.bf16.mxu0 0
    %1694 = vmatpush1.bf16.msra.mxu0 %v1671
    %1695 = vmatprep.subr.bf16.mxu0 0
    %1696 = vmatpush1.bf16.msra.mxu0 %v1672
    %1697 = vmatprep.subr.bf16.mxu0 0
    %1698 = vmatpush1.bf16.msra.mxu0 0
    %1699 = vmatprep.subr.bf16.mxu0 0
    %1700 = vmatpush1.bf16.msra.mxu0 0
    %1701 = vmatprep.subr.bf16.mxu0 0
    %1702 = vmatpush1.bf16.msra.mxu0 0
    %1703 = vmatprep.subr.bf16.mxu0 0
    %1704 = vmatpush1.bf16.msra.mxu0 0
    %1705 = vmatprep.subr.bf16.mxu0 0
    %1706 = vmatpush1.bf16.msra.mxu0 0
    %1707 = vmatprep.subr.bf16.mxu0 0
    %1708 = vmatpush1.bf16.msra.mxu0 0
    %1709 = vmatprep.subr.bf16.mxu0 0
    %1710 = vmatpush1.bf16.msra.mxu0 0
    %1711 = vmatprep.subr.bf16.mxu0 0
    %1712 = vmatpush1.bf16.msra.mxu0 0
    %1713 = vmatprep.mubr.bf16.mxu0 0
    %1714 = vmatmul.mubr.bf16.gmra.mrb[0].mxu0 %v1609
    %v1715 = vpop.f32.mrb[0].mxu0
    %v1716 = vadd.f32 %v1631, %v1715
    %v1717 = vpop.f32.mrb[0].mxu0
    %v1718 = vpop.f32.mrb[0].mxu0
    %v1719 = vadd.f32 %v1631, %v1718
    %v1720 = vpop.f32.mrb[0].mxu0
    %1721 = vdwg.mxu0
    %1722 = vst [vmem:[%s9] sm:$0xff] %v1716
    %1723 = vst [vmem:[%s9 + $0x8] sm:$0xff] %v1719
    // Predicated region
    $region62: #{_mlp_forward_impl.1} parent=1 // pred_check
      _
    $region63: #{_mlp_forward_impl.1} parent=1 // pred_check_branch
      %1725 = sbr.rel (0) target = $region65
    $region64: #{_mlp_forward_impl.1} parent=1 // pred_region
      _
    $region65: #{_mlp_forward_impl.1} parent=1 // pred_fallthru
      _
    // Predicated region
    $region66: #{_mlp_forward_impl.1} parent=1 // pred_check
      _
    $region67: #{_mlp_forward_impl.1} parent=1 // pred_check_branch
      %1727 = sbr.rel (0) target = $region69
    $region68: #{_mlp_forward_impl.1} parent=1 // pred_region
      _
    $region69: #{_mlp_forward_impl.1} parent=1 // pred_fallthru
      _
    %1728 = vsyncpa [#allocation3], 1
    %1729 = vsyncpa [#allocation5], 1
    %1730 = vsyncpa [#allocation8], 1
    %1731 = vsyncpa [#allocation11], 1

</llo_original>
